<compile_context>
chip_gen: v5e
topology: v5e:2x2
jax: 0.10.0
libtpu: 0.0.40
codegen_flags: <defaults>
</compile_context>

<pallas_src>
import functools

import jax
import jax.numpy as jnp
from jax import lax
from jax.experimental import pallas as pl
from jax.experimental.pallas import tpu as pltpu


# --------------------------------------------------------------------------- #
# Pallas kernel
# --------------------------------------------------------------------------- #
def _mh_attend(q, k, v, *, heads, mask):
    """Multi-head scaled-dot-product attention on 2-D tiles.

    q: [T, C] (1/sqrt(head_dim) already folded into the Q projection)
    k, v: [S, C];  mask: [T, S] float or None.
    Returns concat_h(softmax(q_h k_h^T) v_h): [T, C].
    """
    T, C = q.shape
    hd = C // heads
    ctxs = []
    for h in range(heads):                                   # static, unrolled
        sl = slice(h * hd, (h + 1) * hd)
        qh, kh, vh = q[:, sl], k[:, sl], v[:, sl]
        # Contract the last axis of both operands -> no explicit kh transpose.
        score = lax.dot_general(qh, kh, (((1,), (1,)), ((), ())),
                                preferred_element_type=jnp.float32)       # [T, S]
        if mask is not None:
            score = jnp.where(mask > 0.0, score, -1e30)
        m = jnp.max(score, axis=-1, keepdims=True)
        e = jnp.exp(score - m)
        w = e * pl.reciprocal(jnp.sum(e, axis=-1, keepdims=True), approx=False)
        ctxs.append(jnp.dot(w, vh, preferred_element_type=jnp.float32))   # [T, hd]
    # Assemble all heads into one lane-contiguous [T, C] tile so the output
    # projection becomes a single matmul instead of `heads` tiny ones.
    return jnp.concatenate(ctxs, axis=-1)


def multilink_kernel(*refs, heads, has_mask):
    if has_mask:
        (x_ref, key_ref, style_ref, ctx_ref, mask_ref,
         wq_ref, bq_ref, swk_ref, sbk_ref, swv_ref, sbv_ref,
         cwkv_ref, cbkv_ref, wo_ref, bos_ref, boc_ref, o_ref) = refs
    else:
        (x_ref, key_ref, style_ref, ctx_ref,
         wq_ref, bq_ref, swk_ref, sbk_ref, swv_ref, sbv_ref,
         cwkv_ref, cbkv_ref, wo_ref, bos_ref, boc_ref, o_ref) = refs
        mask_ref = None

    x = x_ref[...]                                   # [bb, T, C]
    key = key_ref[...]                               # [bb, P, styles]
    style = style_ref[...]                           # [bb, P, styles]
    ctx = ctx_ref[...]                               # [bb, S, contexts]
    maskv = mask_ref[...] if has_mask else None      # [bb, T, S]

    bb, T, C = x.shape
    P = key.shape[1]
    S = ctx.shape[1]

    wq = wq_ref[...]                                 # [C, 2C] (scale folded in)
    bq = bq_ref[...]                                 # [1, 2C]
    swk, sbk = swk_ref[...], sbk_ref[...]            # [styles, C], [1, C]
    swv, sbv = swv_ref[...], sbv_ref[...]
    cwkv, cbkv = cwkv_ref[...], cbkv_ref[...]        # [contexts, 2C], [1, 2C]
    wo = wo_ref[...]                                 # [2C, out_dim]
    bo_s = bos_ref[...]                              # [1, out_dim]
    bo_c = boc_ref[...]                              # [1, out_dim]

    # Batch-dense projections: fold the batch block into the sublane axis and
    # project once (fewer, wider MXU pushes than per-batch/per-link matmuls).
    q_all = jnp.dot(x.reshape(bb * T, C), wq,
                    preferred_element_type=jnp.float32) + bq               # [bb*T, 2C]
    ks_all = jnp.dot(key.reshape(bb * P, -1), swk,
                     preferred_element_type=jnp.float32) + sbk             # [bb*P, C]
    vs_all = jnp.dot(style.reshape(bb * P, -1), swv,
                     preferred_element_type=jnp.float32) + sbv             # [bb*P, C]
    kvc_all = jnp.dot(ctx.reshape(bb * S, -1), cwkv,
                      preferred_element_type=jnp.float32) + cbkv           # [bb*S, 2C]

    if not has_mask:
        bias_nm = bo_s + bo_c                        # hoisted out of the loop

    for b in range(bb):                              # static, unrolled
        q_s = q_all[b * T:(b + 1) * T, :C]
        q_c = q_all[b * T:(b + 1) * T, C:]
        k_s = ks_all[b * P:(b + 1) * P, :]
        v_s = vs_all[b * P:(b + 1) * P, :]
        k_c = kvc_all[b * S:(b + 1) * S, :C]
        v_c = kvc_all[b * S:(b + 1) * S, C:]
        m = maskv[b] if has_mask else None           # [T, S]

        ctx_s = _mh_attend(q_s, k_s, v_s, heads=heads, mask=None)  # [T, C]
        ctx_c = _mh_attend(q_c, k_c, v_c, heads=heads, mask=m)     # [T, C]

        if has_mask:
            mc = m[:, :1]                            # [T, 1] row scale
            ctx_c = ctx_c * mc                       # (ctx*mc)@W == (ctx@W)*mc
            bias = bo_s + bo_c * mc
        else:
            bias = bias_nm

        # Both links' output projections fused into one [T, 2C] x [2C, out] matmul.
        comb = jnp.concatenate([ctx_s, ctx_c], axis=-1)            # [T, 2C]
        out_b = jnp.dot(comb, wo, preferred_element_type=jnp.float32) + bias
        o_ref[b] = out_b.astype(o_ref.dtype)


# --------------------------------------------------------------------------- #
# One-time parameter packing (do at init time, not per forward call)
# --------------------------------------------------------------------------- #
def pack_multilink_params(params, *, channels, heads, masked):
    (s_wq, s_bq, s_wk, s_bk, s_wv, s_bv, s_wo, s_bo,
     c_wq, c_bq, c_wk, c_bk, c_wv, c_bv, c_wo, c_bo) = params
    hd = channels // heads
    scale = 1.0 / float(hd) ** 0.5
    # Q projections share input x -> one [C, 2C] matmul; scale folded into Wq/bq.
    wq = jnp.concatenate([s_wq, c_wq], axis=1) * scale
    bq = jnp.concatenate([s_bq, c_bq], axis=1) * scale
    # Context-link K and V share their input -> one [contexts, 2C] matmul.
    c_wkv = jnp.concatenate([c_wk, c_wv], axis=1)
    c_bkv = jnp.concatenate([c_bk, c_bv], axis=1)
    # With a mask only output column 0 survives MultiLink.forward, so the masked
    # variant projects straight to a single output column in-kernel.
    out_dim = 1 if masked else channels
    wo = jnp.concatenate([s_wo, c_wo], axis=0)[:, :out_dim]   # [2C, out_dim]
    bo_s = s_bo[:, :out_dim]
    bo_c = c_bo[:, :out_dim]
    return (wq, bq, s_wk, s_bk, s_wv, s_bv, c_wkv, c_bkv, wo, bo_s, bo_c)


# --------------------------------------------------------------------------- #
# Wrapper
# --------------------------------------------------------------------------- #
def multilink_forward(x, key, style, context, mask, packed, *, heads,
                      num_batch_blocks=None):
    """Pallas implementation of MultiLink.forward.

    x: [B, T, channels], key/style: [B, P, styles], context: [B, S, contexts],
    mask: [B, T, S] float or None.
    Returns [B, T, 1] if mask is not None else [B, T, channels].
    """
    B, T, channels = x.shape
    P, styles = key.shape[1], key.shape[2]
    S, contexts = context.shape[1], context.shape[2]
    has_mask = mask is not None

    (wq, bq, s_wk, s_bk, s_wv, s_bv, c_wkv, c_bkv, wo, bo_s, bo_c) = packed
    out_dim = wo.shape[1]
    assert out_dim == (1 if has_mask else channels), \
        "packed params do not match mask-ness; repack with pack_multilink_params"

    # Grid: at most two batch blocks.  Two "parallel" steps keep both v7x
    # TensorCores busy; on single-TC v5e/v6e this costs only one extra grid step
    # while batches inside a block share sublane-dense flattened projections.
    # Pass num_batch_blocks=1 to fully collapse the grid on v5e/v6e.
    if num_batch_blocks is None:
        num_batch_blocks = min(B, 2)
    bb = pl.cdiv(B, num_batch_blocks)
    Bp = bb * num_batch_blocks
    if Bp != B:
        pad = ((0, Bp - B), (0, 0), (0, 0))
        x = jnp.pad(x, pad)
        key = jnp.pad(key, pad)
        style = jnp.pad(style, pad)
        context = jnp.pad(context, pad)
        if has_mask:
            mask = jnp.pad(mask, pad, constant_values=1.0)

    def act_spec(L, Cdim):
        return pl.BlockSpec((bb, L, Cdim), lambda i: (i, 0, 0))

    def w_spec(shape):
        # Constant index_map -> block is resident; no re-DMA across grid steps.
        return pl.BlockSpec(shape, lambda i: (0,) * len(shape))

    in_specs = [act_spec(T, channels), act_spec(P, styles),
                act_spec(P, styles), act_spec(S, contexts)]
    inputs = [x, key, style, context]
    if has_mask:
        in_specs.append(act_spec(T, S))   # no ones-mask DMA in the mask=None path
        inputs.append(mask)
    for p in packed:
        in_specs.append(w_spec(p.shape))
        inputs.append(p)

    kernel = functools.partial(multilink_kernel, heads=heads, has_mask=has_mask)

    out = pl.pallas_call(
        kernel,
        out_shape=jax.ShapeDtypeStruct((Bp, T, out_dim), x.dtype),
        grid_spec=pltpu.PrefetchScalarGridSpec(
            num_scalar_prefetch=0,
            grid=(num_batch_blocks,),
            in_specs=in_specs,
            out_specs=pl.BlockSpec((bb, T, out_dim), lambda i: (i, 0, 0)),
        ),
        compiler_params=pltpu.CompilerParams(
            dimension_semantics=("parallel",),
        ),
    )(*inputs)

    if Bp != B:
        out = out[:B]
    return out


# --------------------------------------------------------------------------- #
# Parameter init (deterministic, mimics nn.Linear uniform(-1/sqrt(fan_in), ...))
# --------------------------------------------------------------------------- #
def linear_params(rng, fan_in, fan_out):
    kw, kb = jax.random.split(rng)
    bound = 1.0 / (fan_in ** 0.5)
    w = jax.random.uniform(kw, (fan_in, fan_out), jnp.float32, -bound, bound)
    b = jax.random.uniform(kb, (1, fan_out), jnp.float32, -bound, bound)
    return w, b


def make_multilink_params(rng, channels, contexts, styles):
    keys = jax.random.split(rng, 9)
    # self.proj = nn.Linear(channels, channels * 2)  -- unused in forward()
    _unused_proj = linear_params(keys[8], channels, channels * 2)
    # link_style: MultiheadAttention(styles, channels, channels, heads)
    s_wq, s_bq = linear_params(keys[0], channels, channels)
    s_wk, s_bk = linear_params(keys[1], styles, channels)
    s_wv, s_bv = linear_params(keys[2], styles, channels)
    s_wo, s_bo = linear_params(keys[3], channels, channels)
    # link_context: MultiheadAttention(contexts, channels, channels, heads)
    c_wq, c_bq = linear_params(keys[4], channels, channels)
    c_wk, c_bk = linear_params(keys[5], contexts, channels)
    c_wv, c_bv = linear_params(keys[6], contexts, channels)
    c_wo, c_bo = linear_params(keys[7], channels, channels)
    return (s_wq, s_bq, s_wk, s_bk, s_wv, s_bv, s_wo, s_bo,
            c_wq, c_bq, c_wk, c_bk, c_wv, c_bv, c_wo, c_bo)


# --------------------------------------------------------------------------- #
# Pure-JAX reference (for correctness check only)
# --------------------------------------------------------------------------- #
def _mha_ref(q_in, k_in, v_in, wq, bq, wk, bk, wv, bv, wo, bo, heads, mask=None):
    q = q_in @ wq + bq
    k = k_in @ wk + bk
    v = v_in @ wv + bv
    B, T, C = q.shape
    S = k.shape[1]
    hd = C // heads
    qh = q.reshape(B, T, heads, hd).transpose(0, 2, 1, 3)
    kh = k.reshape(B, S, heads, hd).transpose(0, 2, 1, 3)
    vh = v.reshape(B, S, heads, hd).transpose(0, 2, 1, 3)
    score = jnp.einsum('bhtd,bhsd->bhts', qh, kh) / (hd ** 0.5)
    if mask is not None:
        score = jnp.where(mask[:, None] > 0.0, score, -1e30)
    w = jax.nn.softmax(score, axis=-1)
    out = jnp.einsum('bhts,bhsd->bhtd', w, vh).transpose(0, 2, 1, 3).reshape(B, T, C)
    out = out @ wo + bo
    if mask is not None:
        out = out * mask[..., :1]
    return out


def multilink_ref(x, key, style, context, mask, params, *, heads):
    (s_wq, s_bq, s_wk, s_bk, s_wv, s_bv, s_wo, s_bo,
     c_wq, c_bq, c_wk, c_bk, c_wv, c_bv, c_wo, c_bo) = params
    x_a = _mha_ref(x, key, style, s_wq, s_bq, s_wk, s_bk, s_wv, s_bv, s_wo, s_bo,
                   heads, mask=None)
    x_b = _mha_ref(x, context, context, c_wq, c_bq, c_wk, c_bk, c_wv, c_bv, c_wo, c_bo,
                   heads, mask=mask)
    out = x_a + x_b
    if mask is not None:
        out = out[..., :1]
    return out


# --------------------------------------------------------------------------- #
# Main
# --------------------------------------------------------------------------- #
if __name__ == "__main__":
    B, T, channels = 2, 16, 32
    P, styles = 8, 16          # prototypes, style channel size
    S, contexts = 12, 24       # context length, context channel size
    heads = 4

    root = jax.random.PRNGKey(0)
    k_x, k_key, k_style, k_ctx, k_par = jax.random.split(root, 5)

    x = jax.random.normal(k_x, (B, T, channels), jnp.float32)
    key = jax.random.normal(k_key, (B, P, styles), jnp.float32)
    style = jax.random.normal(k_style, (B, P, styles), jnp.float32)
    context = jax.random.normal(k_ctx, (B, S, contexts), jnp.float32)

    # valid-length float mask [B, T, S]; at least one valid key per query row
    lens = jnp.array([S, S - 4], jnp.int32)
    mask = (jnp.arange(S)[None, None, :] < lens[:, None, None]).astype(jnp.float32)
    mask = jnp.broadcast_to(mask, (B, T, S))

    params = make_multilink_params(k_par, channels, contexts, styles)
    packed_masked = pack_multilink_params(params, channels=channels, heads=heads,
                                          masked=True)
    packed_nomask = pack_multilink_params(params, channels=channels, heads=heads,
                                          masked=False)

    # masked path -> [B, T, 1], produced directly by the kernel (no wrapper slice)
    out = multilink_forward(x, key, style, context, mask, packed_masked, heads=heads)
    out = jax.block_until_ready(out)
    assert out.shape == (B, T, 1), out.shape
    ref = multilink_ref(x, key, style, context, mask, params, heads=heads)
    assert jnp.allclose(out, ref, atol=2e-4, rtol=2e-4), \
        float(jnp.max(jnp.abs(out - ref)))

    # mask=None path -> [B, T, channels], no ones-mask materialization/DMA
    out_nm = multilink_forward(x, key, style, context, None, packed_nomask,
                               heads=heads)
    out_nm = jax.block_until_ready(out_nm)
    assert out_nm.shape == (B, T, channels), out_nm.shape
    ref_nm = multilink_ref(x, key, style, context, None, params, heads=heads)
    assert jnp.allclose(out_nm, ref_nm, atol=2e-4, rtol=2e-4), \
        float(jnp.max(jnp.abs(out_nm - ref_nm)))

    print("KERNEL_OK")
</pallas_src>

<mosaic_0001>
module attributes {stable_mosaic.version = 11 : i64} {
  func.func @multilink_kernel(%arg0: i32, %arg1: memref<1x16x32xf32, #tpu.memory_space<vmem>>, %arg2: memref<1x8x16xf32, #tpu.memory_space<vmem>>, %arg3: memref<1x8x16xf32, #tpu.memory_space<vmem>>, %arg4: memref<1x12x24xf32, #tpu.memory_space<vmem>>, %arg5: memref<1x16x12xf32, #tpu.memory_space<vmem>>, %arg6: memref<32x64xf32, #tpu.memory_space<vmem>>, %arg7: memref<1x64xf32, #tpu.memory_space<vmem>>, %arg8: memref<16x32xf32, #tpu.memory_space<vmem>>, %arg9: memref<1x32xf32, #tpu.memory_space<vmem>>, %arg10: memref<16x32xf32, #tpu.memory_space<vmem>>, %arg11: memref<1x32xf32, #tpu.memory_space<vmem>>, %arg12: memref<24x64xf32, #tpu.memory_space<vmem>>, %arg13: memref<1x64xf32, #tpu.memory_space<vmem>>, %arg14: memref<64x1xf32, #tpu.memory_space<vmem>>, %arg15: memref<1x1xf32, #tpu.memory_space<vmem>>, %arg16: memref<1x1xf32, #tpu.memory_space<vmem>>, %arg17: memref<1x16x1xf32, #tpu.memory_space<vmem>>) attributes {dimension_semantics = [#tpu.dimension_semantics<parallel>], iteration_bounds = array<i64: 2>, scalar_prefetch = 0 : i64, scratch_operands = 0 : i64, tpu.core_type = #tpu.core_type<tc>, window_params = [{transform_indices = @transform_0, window_bounds = array<i64: 1, 16, 32>}, {transform_indices = @transform_1, window_bounds = array<i64: 1, 8, 16>}, {transform_indices = @transform_2, window_bounds = array<i64: 1, 8, 16>}, {transform_indices = @transform_3, window_bounds = array<i64: 1, 12, 24>}, {transform_indices = @transform_4, window_bounds = array<i64: 1, 16, 12>}, {pipeline_mode = #tpu.pipeline_mode<synchronous>, transform_indices = @transform_5, window_bounds = array<i64: 32, 64>}, {pipeline_mode = #tpu.pipeline_mode<synchronous>, transform_indices = @transform_6, window_bounds = array<i64: 1, 64>}, {pipeline_mode = #tpu.pipeline_mode<synchronous>, transform_indices = @transform_7, window_bounds = array<i64: 16, 32>}, {pipeline_mode = #tpu.pipeline_mode<synchronous>, transform_indices = @transform_8, window_bounds = array<i64: 1, 32>}, {pipeline_mode = #tpu.pipeline_mode<synchronous>, transform_indices = @transform_9, window_bounds = array<i64: 16, 32>}, {pipeline_mode = #tpu.pipeline_mode<synchronous>, transform_indices = @transform_10, window_bounds = array<i64: 1, 32>}, {pipeline_mode = #tpu.pipeline_mode<synchronous>, transform_indices = @transform_11, window_bounds = array<i64: 24, 64>}, {pipeline_mode = #tpu.pipeline_mode<synchronous>, transform_indices = @transform_12, window_bounds = array<i64: 1, 64>}, {pipeline_mode = #tpu.pipeline_mode<synchronous>, transform_indices = @transform_13, window_bounds = array<i64: 64, 1>}, {pipeline_mode = #tpu.pipeline_mode<synchronous>, transform_indices = @transform_14, window_bounds = array<i64: 1, 1>}, {pipeline_mode = #tpu.pipeline_mode<synchronous>, transform_indices = @transform_15, window_bounds = array<i64: 1, 1>}, {transform_indices = @transform_16, window_bounds = array<i64: 1, 16, 1>}]} {
    %c0 = arith.constant 0 : index
    %c0_0 = arith.constant 0 : index
    %c0_1 = arith.constant 0 : index
    %0 = vector.load %arg1[%c0, %c0_0, %c0_1] : memref<1x16x32xf32, #tpu.memory_space<vmem>>, vector<1x16x32xf32>
    %c0_2 = arith.constant 0 : index
    %c0_3 = arith.constant 0 : index
    %c0_4 = arith.constant 0 : index
    %1 = vector.load %arg2[%c0_2, %c0_3, %c0_4] : memref<1x8x16xf32, #tpu.memory_space<vmem>>, vector<1x8x16xf32>
    %c0_5 = arith.constant 0 : index
    %c0_6 = arith.constant 0 : index
    %c0_7 = arith.constant 0 : index
    %2 = vector.load %arg3[%c0_5, %c0_6, %c0_7] : memref<1x8x16xf32, #tpu.memory_space<vmem>>, vector<1x8x16xf32>
    %c0_8 = arith.constant 0 : index
    %c0_9 = arith.constant 0 : index
    %c0_10 = arith.constant 0 : index
    %3 = vector.load %arg4[%c0_8, %c0_9, %c0_10] : memref<1x12x24xf32, #tpu.memory_space<vmem>>, vector<1x12x24xf32>
    %c0_11 = arith.constant 0 : index
    %c0_12 = arith.constant 0 : index
    %c0_13 = arith.constant 0 : index
    %4 = vector.load %arg5[%c0_11, %c0_12, %c0_13] : memref<1x16x12xf32, #tpu.memory_space<vmem>>, vector<1x16x12xf32>
    %c0_14 = arith.constant 0 : index
    %c0_15 = arith.constant 0 : index
    %5 = vector.load %arg6[%c0_14, %c0_15] : memref<32x64xf32, #tpu.memory_space<vmem>>, vector<32x64xf32>
    %c0_16 = arith.constant 0 : index
    %c0_17 = arith.constant 0 : index
    %6 = vector.load %arg7[%c0_16, %c0_17] : memref<1x64xf32, #tpu.memory_space<vmem>>, vector<1x64xf32>
    %c0_18 = arith.constant 0 : index
    %c0_19 = arith.constant 0 : index
    %7 = vector.load %arg8[%c0_18, %c0_19] : memref<16x32xf32, #tpu.memory_space<vmem>>, vector<16x32xf32>
    %c0_20 = arith.constant 0 : index
    %c0_21 = arith.constant 0 : index
    %8 = vector.load %arg9[%c0_20, %c0_21] : memref<1x32xf32, #tpu.memory_space<vmem>>, vector<1x32xf32>
    %c0_22 = arith.constant 0 : index
    %c0_23 = arith.constant 0 : index
    %9 = vector.load %arg10[%c0_22, %c0_23] : memref<16x32xf32, #tpu.memory_space<vmem>>, vector<16x32xf32>
    %c0_24 = arith.constant 0 : index
    %c0_25 = arith.constant 0 : index
    %10 = vector.load %arg11[%c0_24, %c0_25] : memref<1x32xf32, #tpu.memory_space<vmem>>, vector<1x32xf32>
    %c0_26 = arith.constant 0 : index
    %c0_27 = arith.constant 0 : index
    %11 = vector.load %arg12[%c0_26, %c0_27] : memref<24x64xf32, #tpu.memory_space<vmem>>, vector<24x64xf32>
    %c0_28 = arith.constant 0 : index
    %c0_29 = arith.constant 0 : index
    %12 = vector.load %arg13[%c0_28, %c0_29] : memref<1x64xf32, #tpu.memory_space<vmem>>, vector<1x64xf32>
    %c0_30 = arith.constant 0 : index
    %c0_31 = arith.constant 0 : index
    %13 = vector.load %arg14[%c0_30, %c0_31] : memref<64x1xf32, #tpu.memory_space<vmem>>, vector<64x1xf32>
    %c0_32 = arith.constant 0 : index
    %c0_33 = arith.constant 0 : index
    %14 = vector.load %arg15[%c0_32, %c0_33] : memref<1x1xf32, #tpu.memory_space<vmem>>, vector<1x1xf32>
    %c0_34 = arith.constant 0 : index
    %c0_35 = arith.constant 0 : index
    %15 = vector.load %arg16[%c0_34, %c0_35] : memref<1x1xf32, #tpu.memory_space<vmem>>, vector<1x1xf32>
    %16 = vector.shape_cast %0 : vector<1x16x32xf32> to vector<16x32xf32>
    %cst = arith.constant dense<0.000000e+00> : vector<16x64xf32>
    %17 = tpu.matmul %16, %5, %cst {dimension_numbers = #tpu.dot_dimension_numbers<[1], [0], [0], [1], [0, 0, 1, 1], [], []>} : vector<16x32xf32>, vector<32x64xf32>, vector<16x64xf32> -> vector<16x64xf32>
    %18 = vector.broadcast %6 : vector<1x64xf32> to vector<16x64xf32>
    %19 = arith.addf %17, %18 : vector<16x64xf32>
    %20 = vector.shape_cast %1 : vector<1x8x16xf32> to vector<8x16xf32>
    %cst_36 = arith.constant dense<0.000000e+00> : vector<8x32xf32>
    %21 = tpu.matmul %20, %7, %cst_36 {dimension_numbers = #tpu.dot_dimension_numbers<[1], [0], [0], [1], [0, 0, 1, 1], [], []>} : vector<8x16xf32>, vector<16x32xf32>, vector<8x32xf32> -> vector<8x32xf32>
    %22 = vector.broadcast %8 : vector<1x32xf32> to vector<8x32xf32>
    %23 = arith.addf %21, %22 : vector<8x32xf32>
    %24 = vector.shape_cast %2 : vector<1x8x16xf32> to vector<8x16xf32>
    %cst_37 = arith.constant dense<0.000000e+00> : vector<8x32xf32>
    %25 = tpu.matmul %24, %9, %cst_37 {dimension_numbers = #tpu.dot_dimension_numbers<[1], [0], [0], [1], [0, 0, 1, 1], [], []>} : vector<8x16xf32>, vector<16x32xf32>, vector<8x32xf32> -> vector<8x32xf32>
    %26 = vector.broadcast %10 : vector<1x32xf32> to vector<8x32xf32>
    %27 = arith.addf %25, %26 : vector<8x32xf32>
    %28 = vector.shape_cast %3 : vector<1x12x24xf32> to vector<12x24xf32>
    %cst_38 = arith.constant dense<0.000000e+00> : vector<12x64xf32>
    %29 = tpu.matmul %28, %11, %cst_38 {dimension_numbers = #tpu.dot_dimension_numbers<[1], [0], [0], [1], [0, 0, 1, 1], [], []>} : vector<12x24xf32>, vector<24x64xf32>, vector<12x64xf32> -> vector<12x64xf32>
    %30 = vector.broadcast %12 : vector<1x64xf32> to vector<12x64xf32>
    %31 = arith.addf %29, %30 : vector<12x64xf32>
    %32 = vector.extract_strided_slice %19 {offsets = [0, 0], sizes = [16, 32], strides = [1, 1]} : vector<16x64xf32> to vector<16x32xf32>
    %33 = vector.extract_strided_slice %19 {offsets = [0, 32], sizes = [16, 32], strides = [1, 1]} : vector<16x64xf32> to vector<16x32xf32>
    %34 = vector.extract_strided_slice %31 {offsets = [0, 0], sizes = [12, 32], strides = [1, 1]} : vector<12x64xf32> to vector<12x32xf32>
    %35 = vector.extract_strided_slice %31 {offsets = [0, 32], sizes = [12, 32], strides = [1, 1]} : vector<12x64xf32> to vector<12x32xf32>
    %36 = vector.shape_cast %4 : vector<1x16x12xf32> to vector<16x12xf32>
    %37 = vector.extract_strided_slice %32 {offsets = [0, 0], sizes = [16, 8], strides = [1, 1]} : vector<16x32xf32> to vector<16x8xf32>
    %38 = vector.extract_strided_slice %23 {offsets = [0, 0], sizes = [8, 8], strides = [1, 1]} : vector<8x32xf32> to vector<8x8xf32>
    %39 = vector.extract_strided_slice %27 {offsets = [0, 0], sizes = [8, 8], strides = [1, 1]} : vector<8x32xf32> to vector<8x8xf32>
    %cst_39 = arith.constant dense<0.000000e+00> : vector<16x8xf32>
    %40 = tpu.matmul %37, %38, %cst_39 {dimension_numbers = #tpu.dot_dimension_numbers<[1], [1], [0], [0], [0, 0, 1, 0], [], []>} : vector<16x8xf32>, vector<8x8xf32>, vector<16x8xf32> -> vector<16x8xf32>
    %cst_40 = arith.constant dense<0xFF800000> : vector<16xf32>
    %41 = vector.multi_reduction <maximumf>, %40, %cst_40 [1] : vector<16x8xf32> to vector<16xf32>
    %42 = vector.shape_cast %41 : vector<16xf32> to vector<16x1xf32>
    %43 = vector.broadcast %42 : vector<16x1xf32> to vector<16x8xf32>
    %44 = arith.subf %40, %43 : vector<16x8xf32>
    %45 = math.exp %44 : vector<16x8xf32>
    %cst_41 = arith.constant dense<0.000000e+00> : vector<16xf32>
    %46 = vector.multi_reduction <add>, %45, %cst_41 [1] : vector<16x8xf32> to vector<16xf32>
    %47 = vector.shape_cast %46 : vector<16xf32> to vector<16x1xf32>
    %48 = tpu.reciprocal %47 : vector<16x1xf32> -> vector<16x1xf32>
    %49 = vector.broadcast %48 : vector<16x1xf32> to vector<16x8xf32>
    %50 = arith.mulf %45, %49 : vector<16x8xf32>
    %cst_42 = arith.constant dense<0.000000e+00> : vector<16x8xf32>
    %51 = tpu.matmul %50, %39, %cst_42 {dimension_numbers = #tpu.dot_dimension_numbers<[1], [0], [0], [1], [0, 0, 1, 1], [], []>} : vector<16x8xf32>, vector<8x8xf32>, vector<16x8xf32> -> vector<16x8xf32>
    %52 = vector.extract_strided_slice %32 {offsets = [0, 8], sizes = [16, 8], strides = [1, 1]} : vector<16x32xf32> to vector<16x8xf32>
    %53 = vector.extract_strided_slice %23 {offsets = [0, 8], sizes = [8, 8], strides = [1, 1]} : vector<8x32xf32> to vector<8x8xf32>
    %54 = vector.extract_strided_slice %27 {offsets = [0, 8], sizes = [8, 8], strides = [1, 1]} : vector<8x32xf32> to vector<8x8xf32>
    %cst_43 = arith.constant dense<0.000000e+00> : vector<16x8xf32>
    %55 = tpu.matmul %52, %53, %cst_43 {dimension_numbers = #tpu.dot_dimension_numbers<[1], [1], [0], [0], [0, 0, 1, 0], [], []>} : vector<16x8xf32>, vector<8x8xf32>, vector<16x8xf32> -> vector<16x8xf32>
    %cst_44 = arith.constant dense<0xFF800000> : vector<16xf32>
    %56 = vector.multi_reduction <maximumf>, %55, %cst_44 [1] : vector<16x8xf32> to vector<16xf32>
    %57 = vector.shape_cast %56 : vector<16xf32> to vector<16x1xf32>
    %58 = vector.broadcast %57 : vector<16x1xf32> to vector<16x8xf32>
    %59 = arith.subf %55, %58 : vector<16x8xf32>
    %60 = math.exp %59 : vector<16x8xf32>
    %cst_45 = arith.constant dense<0.000000e+00> : vector<16xf32>
    %61 = vector.multi_reduction <add>, %60, %cst_45 [1] : vector<16x8xf32> to vector<16xf32>
    %62 = vector.shape_cast %61 : vector<16xf32> to vector<16x1xf32>
    %63 = tpu.reciprocal %62 : vector<16x1xf32> -> vector<16x1xf32>
    %64 = vector.broadcast %63 : vector<16x1xf32> to vector<16x8xf32>
    %65 = arith.mulf %60, %64 : vector<16x8xf32>
    %cst_46 = arith.constant dense<0.000000e+00> : vector<16x8xf32>
    %66 = tpu.matmul %65, %54, %cst_46 {dimension_numbers = #tpu.dot_dimension_numbers<[1], [0], [0], [1], [0, 0, 1, 1], [], []>} : vector<16x8xf32>, vector<8x8xf32>, vector<16x8xf32> -> vector<16x8xf32>
    %67 = vector.extract_strided_slice %32 {offsets = [0, 16], sizes = [16, 8], strides = [1, 1]} : vector<16x32xf32> to vector<16x8xf32>
    %68 = vector.extract_strided_slice %23 {offsets = [0, 16], sizes = [8, 8], strides = [1, 1]} : vector<8x32xf32> to vector<8x8xf32>
    %69 = vector.extract_strided_slice %27 {offsets = [0, 16], sizes = [8, 8], strides = [1, 1]} : vector<8x32xf32> to vector<8x8xf32>
    %cst_47 = arith.constant dense<0.000000e+00> : vector<16x8xf32>
    %70 = tpu.matmul %67, %68, %cst_47 {dimension_numbers = #tpu.dot_dimension_numbers<[1], [1], [0], [0], [0, 0, 1, 0], [], []>} : vector<16x8xf32>, vector<8x8xf32>, vector<16x8xf32> -> vector<16x8xf32>
    %cst_48 = arith.constant dense<0xFF800000> : vector<16xf32>
    %71 = vector.multi_reduction <maximumf>, %70, %cst_48 [1] : vector<16x8xf32> to vector<16xf32>
    %72 = vector.shape_cast %71 : vector<16xf32> to vector<16x1xf32>
    %73 = vector.broadcast %72 : vector<16x1xf32> to vector<16x8xf32>
    %74 = arith.subf %70, %73 : vector<16x8xf32>
    %75 = math.exp %74 : vector<16x8xf32>
    %cst_49 = arith.constant dense<0.000000e+00> : vector<16xf32>
    %76 = vector.multi_reduction <add>, %75, %cst_49 [1] : vector<16x8xf32> to vector<16xf32>
    %77 = vector.shape_cast %76 : vector<16xf32> to vector<16x1xf32>
    %78 = tpu.reciprocal %77 : vector<16x1xf32> -> vector<16x1xf32>
    %79 = vector.broadcast %78 : vector<16x1xf32> to vector<16x8xf32>
    %80 = arith.mulf %75, %79 : vector<16x8xf32>
    %cst_50 = arith.constant dense<0.000000e+00> : vector<16x8xf32>
    %81 = tpu.matmul %80, %69, %cst_50 {dimension_numbers = #tpu.dot_dimension_numbers<[1], [0], [0], [1], [0, 0, 1, 1], [], []>} : vector<16x8xf32>, vector<8x8xf32>, vector<16x8xf32> -> vector<16x8xf32>
    %82 = vector.extract_strided_slice %32 {offsets = [0, 24], sizes = [16, 8], strides = [1, 1]} : vector<16x32xf32> to vector<16x8xf32>
    %83 = vector.extract_strided_slice %23 {offsets = [0, 24], sizes = [8, 8], strides = [1, 1]} : vector<8x32xf32> to vector<8x8xf32>
    %84 = vector.extract_strided_slice %27 {offsets = [0, 24], sizes = [8, 8], strides = [1, 1]} : vector<8x32xf32> to vector<8x8xf32>
    %cst_51 = arith.constant dense<0.000000e+00> : vector<16x8xf32>
    %85 = tpu.matmul %82, %83, %cst_51 {dimension_numbers = #tpu.dot_dimension_numbers<[1], [1], [0], [0], [0, 0, 1, 0], [], []>} : vector<16x8xf32>, vector<8x8xf32>, vector<16x8xf32> -> vector<16x8xf32>
    %cst_52 = arith.constant dense<0xFF800000> : vector<16xf32>
    %86 = vector.multi_reduction <maximumf>, %85, %cst_52 [1] : vector<16x8xf32> to vector<16xf32>
    %87 = vector.shape_cast %86 : vector<16xf32> to vector<16x1xf32>
    %88 = vector.broadcast %87 : vector<16x1xf32> to vector<16x8xf32>
    %89 = arith.subf %85, %88 : vector<16x8xf32>
    %90 = math.exp %89 : vector<16x8xf32>
    %cst_53 = arith.constant dense<0.000000e+00> : vector<16xf32>
    %91 = vector.multi_reduction <add>, %90, %cst_53 [1] : vector<16x8xf32> to vector<16xf32>
    %92 = vector.shape_cast %91 : vector<16xf32> to vector<16x1xf32>
    %93 = tpu.reciprocal %92 : vector<16x1xf32> -> vector<16x1xf32>
    %94 = vector.broadcast %93 : vector<16x1xf32> to vector<16x8xf32>
    %95 = arith.mulf %90, %94 : vector<16x8xf32>
    %cst_54 = arith.constant dense<0.000000e+00> : vector<16x8xf32>
    %96 = tpu.matmul %95, %84, %cst_54 {dimension_numbers = #tpu.dot_dimension_numbers<[1], [0], [0], [1], [0, 0, 1, 1], [], []>} : vector<16x8xf32>, vector<8x8xf32>, vector<16x8xf32> -> vector<16x8xf32>
    %97 = tpu.concatenate %51, %66, %81, %96 in 1 : vector<16x8xf32>, vector<16x8xf32>, vector<16x8xf32>, vector<16x8xf32> -> vector<16x32xf32>
    %98 = vector.extract_strided_slice %33 {offsets = [0, 0], sizes = [16, 8], strides = [1, 1]} : vector<16x32xf32> to vector<16x8xf32>
    %99 = vector.extract_strided_slice %34 {offsets = [0, 0], sizes = [12, 8], strides = [1, 1]} : vector<12x32xf32> to vector<12x8xf32>
    %100 = vector.extract_strided_slice %35 {offsets = [0, 0], sizes = [12, 8], strides = [1, 1]} : vector<12x32xf32> to vector<12x8xf32>
    %cst_55 = arith.constant dense<0.000000e+00> : vector<16x12xf32>
    %101 = tpu.matmul %98, %99, %cst_55 {dimension_numbers = #tpu.dot_dimension_numbers<[1], [1], [0], [0], [0, 0, 1, 0], [], []>} : vector<16x8xf32>, vector<12x8xf32>, vector<16x12xf32> -> vector<16x12xf32>
    %cst_56 = arith.constant 0.000000e+00 : f32
    %102 = vector.broadcast %cst_56 : f32 to vector<16x12xf32>
    %103 = arith.cmpf ogt, %36, %102 : vector<16x12xf32>
    %cst_57 = arith.constant -1.000000e+30 : f32
    %104 = vector.broadcast %cst_57 : f32 to vector<16x12xf32>
    %105 = arith.select %103, %101, %104 : vector<16x12xi1>, vector<16x12xf32>
    %cst_58 = arith.constant dense<0xFF800000> : vector<16xf32>
    %106 = vector.multi_reduction <maximumf>, %105, %cst_58 [1] : vector<16x12xf32> to vector<16xf32>
    %107 = vector.shape_cast %106 : vector<16xf32> to vector<16x1xf32>
    %108 = vector.broadcast %107 : vector<16x1xf32> to vector<16x12xf32>
    %109 = arith.subf %105, %108 : vector<16x12xf32>
    %110 = math.exp %109 : vector<16x12xf32>
    %cst_59 = arith.constant dense<0.000000e+00> : vector<16xf32>
    %111 = vector.multi_reduction <add>, %110, %cst_59 [1] : vector<16x12xf32> to vector<16xf32>
    %112 = vector.shape_cast %111 : vector<16xf32> to vector<16x1xf32>
    %113 = tpu.reciprocal %112 : vector<16x1xf32> -> vector<16x1xf32>
    %114 = vector.broadcast %113 : vector<16x1xf32> to vector<16x12xf32>
    %115 = arith.mulf %110, %114 : vector<16x12xf32>
    %cst_60 = arith.constant dense<0.000000e+00> : vector<16x8xf32>
    %116 = tpu.matmul %115, %100, %cst_60 {dimension_numbers = #tpu.dot_dimension_numbers<[1], [0], [0], [1], [0, 0, 1, 1], [], []>} : vector<16x12xf32>, vector<12x8xf32>, vector<16x8xf32> -> vector<16x8xf32>
    %117 = vector.extract_strided_slice %33 {offsets = [0, 8], sizes = [16, 8], strides = [1, 1]} : vector<16x32xf32> to vector<16x8xf32>
    %118 = vector.extract_strided_slice %34 {offsets = [0, 8], sizes = [12, 8], strides = [1, 1]} : vector<12x32xf32> to vector<12x8xf32>
    %119 = vector.extract_strided_slice %35 {offsets = [0, 8], sizes = [12, 8], strides = [1, 1]} : vector<12x32xf32> to vector<12x8xf32>
    %cst_61 = arith.constant dense<0.000000e+00> : vector<16x12xf32>
    %120 = tpu.matmul %117, %118, %cst_61 {dimension_numbers = #tpu.dot_dimension_numbers<[1], [1], [0], [0], [0, 0, 1, 0], [], []>} : vector<16x8xf32>, vector<12x8xf32>, vector<16x12xf32> -> vector<16x12xf32>
    %cst_62 = arith.constant 0.000000e+00 : f32
    %121 = vector.broadcast %cst_62 : f32 to vector<16x12xf32>
    %122 = arith.cmpf ogt, %36, %121 : vector<16x12xf32>
    %cst_63 = arith.constant -1.000000e+30 : f32
    %123 = vector.broadcast %cst_63 : f32 to vector<16x12xf32>
    %124 = arith.select %122, %120, %123 : vector<16x12xi1>, vector<16x12xf32>
    %cst_64 = arith.constant dense<0xFF800000> : vector<16xf32>
    %125 = vector.multi_reduction <maximumf>, %124, %cst_64 [1] : vector<16x12xf32> to vector<16xf32>
    %126 = vector.shape_cast %125 : vector<16xf32> to vector<16x1xf32>
    %127 = vector.broadcast %126 : vector<16x1xf32> to vector<16x12xf32>
    %128 = arith.subf %124, %127 : vector<16x12xf32>
    %129 = math.exp %128 : vector<16x12xf32>
    %cst_65 = arith.constant dense<0.000000e+00> : vector<16xf32>
    %130 = vector.multi_reduction <add>, %129, %cst_65 [1] : vector<16x12xf32> to vector<16xf32>
    %131 = vector.shape_cast %130 : vector<16xf32> to vector<16x1xf32>
    %132 = tpu.reciprocal %131 : vector<16x1xf32> -> vector<16x1xf32>
    %133 = vector.broadcast %132 : vector<16x1xf32> to vector<16x12xf32>
    %134 = arith.mulf %129, %133 : vector<16x12xf32>
    %cst_66 = arith.constant dense<0.000000e+00> : vector<16x8xf32>
    %135 = tpu.matmul %134, %119, %cst_66 {dimension_numbers = #tpu.dot_dimension_numbers<[1], [0], [0], [1], [0, 0, 1, 1], [], []>} : vector<16x12xf32>, vector<12x8xf32>, vector<16x8xf32> -> vector<16x8xf32>
    %136 = vector.extract_strided_slice %33 {offsets = [0, 16], sizes = [16, 8], strides = [1, 1]} : vector<16x32xf32> to vector<16x8xf32>
    %137 = vector.extract_strided_slice %34 {offsets = [0, 16], sizes = [12, 8], strides = [1, 1]} : vector<12x32xf32> to vector<12x8xf32>
    %138 = vector.extract_strided_slice %35 {offsets = [0, 16], sizes = [12, 8], strides = [1, 1]} : vector<12x32xf32> to vector<12x8xf32>
    %cst_67 = arith.constant dense<0.000000e+00> : vector<16x12xf32>
    %139 = tpu.matmul %136, %137, %cst_67 {dimension_numbers = #tpu.dot_dimension_numbers<[1], [1], [0], [0], [0, 0, 1, 0], [], []>} : vector<16x8xf32>, vector<12x8xf32>, vector<16x12xf32> -> vector<16x12xf32>
    %cst_68 = arith.constant 0.000000e+00 : f32
    %140 = vector.broadcast %cst_68 : f32 to vector<16x12xf32>
    %141 = arith.cmpf ogt, %36, %140 : vector<16x12xf32>
    %cst_69 = arith.constant -1.000000e+30 : f32
    %142 = vector.broadcast %cst_69 : f32 to vector<16x12xf32>
    %143 = arith.select %141, %139, %142 : vector<16x12xi1>, vector<16x12xf32>
    %cst_70 = arith.constant dense<0xFF800000> : vector<16xf32>
    %144 = vector.multi_reduction <maximumf>, %143, %cst_70 [1] : vector<16x12xf32> to vector<16xf32>
    %145 = vector.shape_cast %144 : vector<16xf32> to vector<16x1xf32>
    %146 = vector.broadcast %145 : vector<16x1xf32> to vector<16x12xf32>
    %147 = arith.subf %143, %146 : vector<16x12xf32>
    %148 = math.exp %147 : vector<16x12xf32>
    %cst_71 = arith.constant dense<0.000000e+00> : vector<16xf32>
    %149 = vector.multi_reduction <add>, %148, %cst_71 [1] : vector<16x12xf32> to vector<16xf32>
    %150 = vector.shape_cast %149 : vector<16xf32> to vector<16x1xf32>
    %151 = tpu.reciprocal %150 : vector<16x1xf32> -> vector<16x1xf32>
    %152 = vector.broadcast %151 : vector<16x1xf32> to vector<16x12xf32>
    %153 = arith.mulf %148, %152 : vector<16x12xf32>
    %cst_72 = arith.constant dense<0.000000e+00> : vector<16x8xf32>
    %154 = tpu.matmul %153, %138, %cst_72 {dimension_numbers = #tpu.dot_dimension_numbers<[1], [0], [0], [1], [0, 0, 1, 1], [], []>} : vector<16x12xf32>, vector<12x8xf32>, vector<16x8xf32> -> vector<16x8xf32>
    %155 = vector.extract_strided_slice %33 {offsets = [0, 24], sizes = [16, 8], strides = [1, 1]} : vector<16x32xf32> to vector<16x8xf32>
    %156 = vector.extract_strided_slice %34 {offsets = [0, 24], sizes = [12, 8], strides = [1, 1]} : vector<12x32xf32> to vector<12x8xf32>
    %157 = vector.extract_strided_slice %35 {offsets = [0, 24], sizes = [12, 8], strides = [1, 1]} : vector<12x32xf32> to vector<12x8xf32>
    %cst_73 = arith.constant dense<0.000000e+00> : vector<16x12xf32>
    %158 = tpu.matmul %155, %156, %cst_73 {dimension_numbers = #tpu.dot_dimension_numbers<[1], [1], [0], [0], [0, 0, 1, 0], [], []>} : vector<16x8xf32>, vector<12x8xf32>, vector<16x12xf32> -> vector<16x12xf32>
    %cst_74 = arith.constant 0.000000e+00 : f32
    %159 = vector.broadcast %cst_74 : f32 to vector<16x12xf32>
    %160 = arith.cmpf ogt, %36, %159 : vector<16x12xf32>
    %cst_75 = arith.constant -1.000000e+30 : f32
    %161 = vector.broadcast %cst_75 : f32 to vector<16x12xf32>
    %162 = arith.select %160, %158, %161 : vector<16x12xi1>, vector<16x12xf32>
    %cst_76 = arith.constant dense<0xFF800000> : vector<16xf32>
    %163 = vector.multi_reduction <maximumf>, %162, %cst_76 [1] : vector<16x12xf32> to vector<16xf32>
    %164 = vector.shape_cast %163 : vector<16xf32> to vector<16x1xf32>
    %165 = vector.broadcast %164 : vector<16x1xf32> to vector<16x12xf32>
    %166 = arith.subf %162, %165 : vector<16x12xf32>
    %167 = math.exp %166 : vector<16x12xf32>
    %cst_77 = arith.constant dense<0.000000e+00> : vector<16xf32>
    %168 = vector.multi_reduction <add>, %167, %cst_77 [1] : vector<16x12xf32> to vector<16xf32>
    %169 = vector.shape_cast %168 : vector<16xf32> to vector<16x1xf32>
    %170 = tpu.reciprocal %169 : vector<16x1xf32> -> vector<16x1xf32>
    %171 = vector.broadcast %170 : vector<16x1xf32> to vector<16x12xf32>
    %172 = arith.mulf %167, %171 : vector<16x12xf32>
    %cst_78 = arith.constant dense<0.000000e+00> : vector<16x8xf32>
    %173 = tpu.matmul %172, %157, %cst_78 {dimension_numbers = #tpu.dot_dimension_numbers<[1], [0], [0], [1], [0, 0, 1, 1], [], []>} : vector<16x12xf32>, vector<12x8xf32>, vector<16x8xf32> -> vector<16x8xf32>
    %174 = tpu.concatenate %116, %135, %154, %173 in 1 : vector<16x8xf32>, vector<16x8xf32>, vector<16x8xf32>, vector<16x8xf32> -> vector<16x32xf32>
    %175 = vector.extract_strided_slice %36 {offsets = [0, 0], sizes = [16, 1], strides = [1, 1]} : vector<16x12xf32> to vector<16x1xf32>
    %176 = vector.broadcast %175 : vector<16x1xf32> to vector<16x32xf32>
    %177 = arith.mulf %174, %176 : vector<16x32xf32>
    %178 = vector.broadcast %15 : vector<1x1xf32> to vector<16x1xf32>
    %179 = arith.mulf %178, %175 : vector<16x1xf32>
    %180 = vector.broadcast %14 : vector<1x1xf32> to vector<16x1xf32>
    %181 = arith.addf %180, %179 : vector<16x1xf32>
    %182 = tpu.concatenate %97, %177 in 1 : vector<16x32xf32>, vector<16x32xf32> -> vector<16x64xf32>
    %cst_79 = arith.constant dense<0.000000e+00> : vector<16x1xf32>
    %183 = tpu.matmul %182, %13, %cst_79 {dimension_numbers = #tpu.dot_dimension_numbers<[1], [0], [0], [1], [0, 0, 1, 1], [], []>} : vector<16x64xf32>, vector<64x1xf32>, vector<16x1xf32> -> vector<16x1xf32>
    %184 = arith.addf %183, %181 : vector<16x1xf32>
    %c0_80 = arith.constant 0 : index
    %c0_81 = arith.constant 0 : index
    %c0_82 = arith.constant 0 : index
    %185 = vector.load %arg17[%c0_80, %c0_81, %c0_82] : memref<1x16x1xf32, #tpu.memory_space<vmem>>, vector<1x16x1xf32>
    %186 = vector.shape_cast %185 : vector<1x16x1xf32> to vector<16x1xf32>
    %187 = vector.shape_cast %184 : vector<16x1xf32> to vector<1x16x1xf32>
    tpu.vector_store %arg17[%c0_80, %c0_81, %c0_82], %187 {strides = array<i32>} : memref<1x16x1xf32, #tpu.memory_space<vmem>>, vector<1x16x1xf32>,
    return
  }
  func.func @transform_0(%arg0: i32) -> (i32, i32, i32) {
    %c0_i32 = arith.constant 0 : i32
    %c0_i32_0 = arith.constant 0 : i32
    %c0_i32_1 = arith.constant 0 : i32
    return %arg0, %c0_i32, %c0_i32_0 : i32, i32, i32
  }
  func.func @transform_1(%arg0: i32) -> (i32, i32, i32) {
    %c0_i32 = arith.constant 0 : i32
    %c0_i32_0 = arith.constant 0 : i32
    %c0_i32_1 = arith.constant 0 : i32
    return %arg0, %c0_i32, %c0_i32_0 : i32, i32, i32
  }
  func.func @transform_2(%arg0: i32) -> (i32, i32, i32) {
    %c0_i32 = arith.constant 0 : i32
    %c0_i32_0 = arith.constant 0 : i32
    %c0_i32_1 = arith.constant 0 : i32
    return %arg0, %c0_i32, %c0_i32_0 : i32, i32, i32
  }
  func.func @transform_3(%arg0: i32) -> (i32, i32, i32) {
    %c0_i32 = arith.constant 0 : i32
    %c0_i32_0 = arith.constant 0 : i32
    %c0_i32_1 = arith.constant 0 : i32
    return %arg0, %c0_i32, %c0_i32_0 : i32, i32, i32
  }
  func.func @transform_4(%arg0: i32) -> (i32, i32, i32) {
    %c0_i32 = arith.constant 0 : i32
    %c0_i32_0 = arith.constant 0 : i32
    %c0_i32_1 = arith.constant 0 : i32
    return %arg0, %c0_i32, %c0_i32_0 : i32, i32, i32
  }
  func.func @transform_5(%arg0: i32) -> (i32, i32) {
    %c0_i32 = arith.constant 0 : i32
    %c0_i32_0 = arith.constant 0 : i32
    %c0_i32_1 = arith.constant 0 : i32
    return %c0_i32, %c0_i32_0 : i32, i32
  }
  func.func @transform_6(%arg0: i32) -> (i32, i32) {
    %c0_i32 = arith.constant 0 : i32
    %c0_i32_0 = arith.constant 0 : i32
    %c0_i32_1 = arith.constant 0 : i32
    return %c0_i32, %c0_i32_0 : i32, i32
  }
  func.func @transform_7(%arg0: i32) -> (i32, i32) {
    %c0_i32 = arith.constant 0 : i32
    %c0_i32_0 = arith.constant 0 : i32
    %c0_i32_1 = arith.constant 0 : i32
    return %c0_i32, %c0_i32_0 : i32, i32
  }
  func.func @transform_8(%arg0: i32) -> (i32, i32) {
    %c0_i32 = arith.constant 0 : i32
    %c0_i32_0 = arith.constant 0 : i32
    %c0_i32_1 = arith.constant 0 : i32
    return %c0_i32, %c0_i32_0 : i32, i32
  }
  func.func @transform_9(%arg0: i32) -> (i32, i32) {
    %c0_i32 = arith.constant 0 : i32
    %c0_i32_0 = arith.constant 0 : i32
    %c0_i32_1 = arith.constant 0 : i32
    return %c0_i32, %c0_i32_0 : i32, i32
  }
  func.func @transform_10(%arg0: i32) -> (i32, i32) {
    %c0_i32 = arith.constant 0 : i32
    %c0_i32_0 = arith.constant 0 : i32
    %c0_i32_1 = arith.constant 0 : i32
    return %c0_i32, %c0_i32_0 : i32, i32
  }
  func.func @transform_11(%arg0: i32) -> (i32, i32) {
    %c0_i32 = arith.constant 0 : i32
    %c0_i32_0 = arith.constant 0 : i32
    %c0_i32_1 = arith.constant 0 : i32
    return %c0_i32, %c0_i32_0 : i32, i32
  }
  func.func @transform_12(%arg0: i32) -> (i32, i32) {
    %c0_i32 = arith.constant 0 : i32
    %c0_i32_0 = arith.constant 0 : i32
    %c0_i32_1 = arith.constant 0 : i32
    return %c0_i32, %c0_i32_0 : i32, i32
  }
  func.func @transform_13(%arg0: i32) -> (i32, i32) {
    %c0_i32 = arith.constant 0 : i32
    %c0_i32_0 = arith.constant 0 : i32
    %c0_i32_1 = arith.constant 0 : i32
    return %c0_i32, %c0_i32_0 : i32, i32
  }
  func.func @transform_14(%arg0: i32) -> (i32, i32) {
    %c0_i32 = arith.constant 0 : i32
    %c0_i32_0 = arith.constant 0 : i32
    %c0_i32_1 = arith.constant 0 : i32
    return %c0_i32, %c0_i32_0 : i32, i32
  }
  func.func @transform_15(%arg0: i32) -> (i32, i32) {
    %c0_i32 = arith.constant 0 : i32
    %c0_i32_0 = arith.constant 0 : i32
    %c0_i32_1 = arith.constant 0 : i32
    return %c0_i32, %c0_i32_0 : i32, i32
  }
  func.func @transform_16(%arg0: i32) -> (i32, i32, i32) {
    %c0_i32 = arith.constant 0 : i32
    %c0_i32_0 = arith.constant 0 : i32
    %c0_i32_1 = arith.constant 0 : i32
    return %arg0, %c0_i32, %c0_i32_0 : i32, i32, i32
  }
}

</mosaic_0001>

<llo_original>
// kernel: tpu_custom_call.1
$region0: #{tpu_custom_call.1}
  #allocation0 [shape = 'u32[]', space=smem, size = 0x4, offset = 0x4, fixed_abs, tag = 'smem constant byte address 0x4 - core index']
  #allocation1 [shape = 'u32[72,128]{1,0:T(1,128)}', space=vmem, size = 0x9000, scoped, tag = 'internal scratch']
  #allocation2 [shape = 'f32[1,1]{1,0:T(1,128)S(1)}', space=vmem, size = 0x200, scoped, tag = 'scoped memory for tpu_custom_call.1']
  #allocation3 [shape = 'f32[1,1]{1,0:T(1,128)S(1)}', space=vmem, size = 0x200, scoped, tag = 'scoped memory for tpu_custom_call.1']
  %s0 = inlined_call_operand.vmem [shape: f32[2,16,32], index: 0, kind: input, shape index: {}]
  %s1 = inlined_call_operand.vmem [shape: f32[2,8,16], index: 1, kind: input, shape index: {}]
  %s2 = inlined_call_operand.vmem [shape: f32[2,8,16], index: 2, kind: input, shape index: {}]
  %s3 = inlined_call_operand.vmem [shape: f32[2,12,24], index: 3, kind: input, shape index: {}]
  %s4 = inlined_call_operand.vmem [shape: f32[2,16,12], index: 4, kind: input, shape index: {}]
  %s5 = inlined_call_operand.vmem [shape: f32[32,64], index: 5, kind: input, shape index: {}]
  %s6 = inlined_call_operand.vmem [shape: f32[1,64], index: 6, kind: input, shape index: {}]
  %s7 = inlined_call_operand.vmem [shape: f32[16,32], index: 7, kind: input, shape index: {}]
  %s8 = inlined_call_operand.vmem [shape: f32[1,32], index: 8, kind: input, shape index: {}]
  %s9 = inlined_call_operand.vmem [shape: f32[16,32], index: 9, kind: input, shape index: {}]
  %s10 = inlined_call_operand.vmem [shape: f32[1,32], index: 10, kind: input, shape index: {}]
  %s11 = inlined_call_operand.vmem [shape: f32[24,64], index: 11, kind: input, shape index: {}]
  %s12 = inlined_call_operand.vmem [shape: f32[1,64], index: 12, kind: input, shape index: {}]
  %s13 = inlined_call_operand.vmem [shape: f32[64,1], index: 13, kind: input, shape index: {}]
  %s14 = inlined_call_operand.<no memory space> [shape: f32[1,1], index: 14, kind: input, shape index: {}]
  %s15 = inlined_call_operand.<no memory space> [shape: f32[1,1], index: 15, kind: input, shape index: {}]
  %s16 = inlined_call_operand.vmem [shape: f32[2,16,1], index: 16, kind: output, shape index: {}]
  %s17 = sld [smem:[#allocation0]]
  $region97: #{tpu_custom_call.1} parent=0
    _
  %s19 = ssub.s32 1, %s17
  %s20 = scalar_select 0, %s19, %s17
  %v21 = vstv %s14
  %22 = vst [vmem:[#allocation2] sm:$0x1] %v21
  %v23 = vstv %s15
  %24 = vst [vmem:[#allocation3] sm:$0x1] %v23
  loop: start=0, step=1, limit=4
  $region2: #{tpu_custom_call.1} parent=0 // loop_pre_header
    _
  $region3: #{tpu_custom_call.1} parent=0 // loop_header
    %s26 = sphi 0, %s30
    %p27 = scmp.ge.s32.totalorder %s26, 4
    %s36 = sphi 0, %s38
    %s39 = sphi 0, %s36
    %s40 = sphi 0, %s39
    %s56 = sphi 0, %s40
    %s62 = sphi 0, %s64
    %s65 = sphi 0, %s62
    %s66 = sphi 0, %s65
    %s82 = sphi 0, %s66
    %s88 = sphi 0, %s90
    %s91 = sphi 0, %s88
    %s92 = sphi 0, %s91
    %s108 = sphi 0, %s92
    %s114 = sphi 0, %s116
    %s117 = sphi 0, %s114
    %s118 = sphi 0, %s117
    %s134 = sphi 0, %s118
    %s140 = sphi 0, %s142
    %s143 = sphi 0, %s140
    %s144 = sphi 0, %s143
    %s160 = sphi 0, %s144
    %s164 = sphi 0, %s164
    %s166 = sphi 0, %s164
    %s167 = sphi 0, %s166
    %s181 = sphi 0, %s167
    %s185 = sphi 0, %s185
    %s187 = sphi 0, %s185
    %s188 = sphi 0, %s187
    %s202 = sphi 0, %s188
    %s206 = sphi 0, %s206
    %s208 = sphi 0, %s206
    %s209 = sphi 0, %s208
    %s223 = sphi 0, %s209
    %s227 = sphi 0, %s227
    %s229 = sphi 0, %s227
    %s230 = sphi 0, %s229
    %s244 = sphi 0, %s230
    %s248 = sphi 0, %s248
    %s250 = sphi 0, %s248
    %s251 = sphi 0, %s250
    %s265 = sphi 0, %s251
    %s269 = sphi 0, %s269
    %s271 = sphi 0, %s269
    %s272 = sphi 0, %s271
    %s286 = sphi 0, %s272
    %s290 = sphi 0, %s290
    %s292 = sphi 0, %s290
    %s293 = sphi 0, %s292
    %s307 = sphi 0, %s293
    %s311 = sphi 0, %s311
    %s313 = sphi 0, %s311
    %s314 = sphi 0, %s313
    %s328 = sphi 0, %s314
    %s332 = sphi 0, %s332
    %s334 = sphi 0, %s332
    %s335 = sphi 0, %s334
    %s349 = sphi 0, %s335
    %s353 = sphi 0, %s353
    %s355 = sphi 0, %s353
    %s356 = sphi 0, %s355
    %s370 = sphi 0, %s356
    %s374 = sphi 0, %s374
    %s376 = sphi 0, %s374
    %s377 = sphi 0, %s376
    %s391 = sphi 0, %s377
    %s397 = sphi 0, %s399
    %s400 = sphi 0, %s397
    %s401 = sphi 0, %s400
    %s417 = sphi 0, %s401
  $region4: #{tpu_custom_call.1} parent=0 // loop_header_branch
    %29 = sbr.rel (%p27) target = $region8
  $region5: #{tpu_custom_call.1} parent=0 // loop_body
    %s31 = ssub.s32 %s26, 1
    %s32 = ssub.s32 %s26, 2
    %s33 = sadd.s32 %s26, 1
    %s34 = ssub.s32 %s26, %s33
    %p35 = scmp.eq.s32.totalorder %s34, 0
    %s37 = sadd.s32 %s36, 1
    %s38 = scalar_select %p35, %s36, %s37
    %p41 = pneg %p35
    %p42 = scmp.eq.s32.totalorder %s26, 1
    %p43 = por %p41, %p42
    %p44 = scmp.ne.s32.totalorder %s36, %s39
    %p45 = scmp.eq.s32.totalorder %s26, 0
    %p46 = por %p44, %p45
    %p47 = scmp.ne.s32.totalorder %s36, %s39
    %p48 = scmp.eq.s32.totalorder %s31, 1
    %p49 = por %p47, %p48
    %p50 = scmp.ne.s32.totalorder %s39, %s40
    %p51 = scmp.eq.s32.totalorder %s31, 0
    %p52 = por %p50, %p51
    %p53 = scmp.ne.s32.totalorder %s39, %s40
    %p54 = scmp.eq.s32.totalorder %s32, 1
    %p55 = por %p53, %p54
    %p57 = scmp.ne.s32.totalorder %s40, %s56
    %p58 = scmp.eq.s32.totalorder %s32, 0
    %p59 = por %p57, %p58
    %s60 = ssub.s32 %s26, %s33
    %p61 = scmp.eq.s32.totalorder %s60, 0
    %s63 = sadd.s32 %s62, 1
    %s64 = scalar_select %p61, %s62, %s63
    %p67 = pneg %p61
    %p68 = scmp.eq.s32.totalorder %s26, 1
    %p69 = por %p67, %p68
    %p70 = scmp.ne.s32.totalorder %s62, %s65
    %p71 = scmp.eq.s32.totalorder %s26, 0
    %p72 = por %p70, %p71
    %p73 = scmp.ne.s32.totalorder %s62, %s65
    %p74 = scmp.eq.s32.totalorder %s31, 1
    %p75 = por %p73, %p74
    %p76 = scmp.ne.s32.totalorder %s65, %s66
    %p77 = scmp.eq.s32.totalorder %s31, 0
    %p78 = por %p76, %p77
    %p79 = scmp.ne.s32.totalorder %s65, %s66
    %p80 = scmp.eq.s32.totalorder %s32, 1
    %p81 = por %p79, %p80
    %p83 = scmp.ne.s32.totalorder %s66, %s82
    %p84 = scmp.eq.s32.totalorder %s32, 0
    %p85 = por %p83, %p84
    %s86 = ssub.s32 %s26, %s33
    %p87 = scmp.eq.s32.totalorder %s86, 0
    %s89 = sadd.s32 %s88, 1
    %s90 = scalar_select %p87, %s88, %s89
    %p93 = pneg %p87
    %p94 = scmp.eq.s32.totalorder %s26, 1
    %p95 = por %p93, %p94
    %p96 = scmp.ne.s32.totalorder %s88, %s91
    %p97 = scmp.eq.s32.totalorder %s26, 0
    %p98 = por %p96, %p97
    %p99 = scmp.ne.s32.totalorder %s88, %s91
    %p100 = scmp.eq.s32.totalorder %s31, 1
    %p101 = por %p99, %p100
    %p102 = scmp.ne.s32.totalorder %s91, %s92
    %p103 = scmp.eq.s32.totalorder %s31, 0
    %p104 = por %p102, %p103
    %p105 = scmp.ne.s32.totalorder %s91, %s92
    %p106 = scmp.eq.s32.totalorder %s32, 1
    %p107 = por %p105, %p106
    %p109 = scmp.ne.s32.totalorder %s92, %s108
    %p110 = scmp.eq.s32.totalorder %s32, 0
    %p111 = por %p109, %p110
    %s112 = ssub.s32 %s26, %s33
    %p113 = scmp.eq.s32.totalorder %s112, 0
    %s115 = sadd.s32 %s114, 1
    %s116 = scalar_select %p113, %s114, %s115
    %p119 = pneg %p113
    %p120 = scmp.eq.s32.totalorder %s26, 1
    %p121 = por %p119, %p120
    %p122 = scmp.ne.s32.totalorder %s114, %s117
    %p123 = scmp.eq.s32.totalorder %s26, 0
    %p124 = por %p122, %p123
    %p125 = scmp.ne.s32.totalorder %s114, %s117
    %p126 = scmp.eq.s32.totalorder %s31, 1
    %p127 = por %p125, %p126
    %p128 = scmp.ne.s32.totalorder %s117, %s118
    %p129 = scmp.eq.s32.totalorder %s31, 0
    %p130 = por %p128, %p129
    %p131 = scmp.ne.s32.totalorder %s117, %s118
    %p132 = scmp.eq.s32.totalorder %s32, 1
    %p133 = por %p131, %p132
    %p135 = scmp.ne.s32.totalorder %s118, %s134
    %p136 = scmp.eq.s32.totalorder %s32, 0
    %p137 = por %p135, %p136
    %s138 = ssub.s32 %s26, %s33
    %p139 = scmp.eq.s32.totalorder %s138, 0
    %s141 = sadd.s32 %s140, 1
    %s142 = scalar_select %p139, %s140, %s141
    %p145 = pneg %p139
    %p146 = scmp.eq.s32.totalorder %s26, 1
    %p147 = por %p145, %p146
    %p148 = scmp.ne.s32.totalorder %s140, %s143
    %p149 = scmp.eq.s32.totalorder %s26, 0
    %p150 = por %p148, %p149
    %p151 = scmp.ne.s32.totalorder %s140, %s143
    %p152 = scmp.eq.s32.totalorder %s31, 1
    %p153 = por %p151, %p152
    %p154 = scmp.ne.s32.totalorder %s143, %s144
    %p155 = scmp.eq.s32.totalorder %s31, 0
    %p156 = por %p154, %p155
    %p157 = scmp.ne.s32.totalorder %s143, %s144
    %p158 = scmp.eq.s32.totalorder %s32, 1
    %p159 = por %p157, %p158
    %p161 = scmp.ne.s32.totalorder %s144, %s160
    %p162 = scmp.eq.s32.totalorder %s32, 0
    %p163 = por %p161, %p162
    %s165 = sadd.s32 %s164, 1
    %p168 = scmp.eq.s32.totalorder %s26, 1
    %p169 = scmp.ne.s32.totalorder %s164, %s166
    %p170 = scmp.eq.s32.totalorder %s26, 0
    %p171 = por %p169, %p170
    %p172 = scmp.ne.s32.totalorder %s164, %s166
    %p173 = scmp.eq.s32.totalorder %s31, 1
    %p174 = por %p172, %p173
    %p175 = scmp.ne.s32.totalorder %s166, %s167
    %p176 = scmp.eq.s32.totalorder %s31, 0
    %p177 = por %p175, %p176
    %p178 = scmp.ne.s32.totalorder %s166, %s167
    %p179 = scmp.eq.s32.totalorder %s32, 1
    %p180 = por %p178, %p179
    %p182 = scmp.ne.s32.totalorder %s167, %s181
    %p183 = scmp.eq.s32.totalorder %s32, 0
    %p184 = por %p182, %p183
    %s186 = sadd.s32 %s185, 1
    %p189 = scmp.eq.s32.totalorder %s26, 1
    %p190 = scmp.ne.s32.totalorder %s185, %s187
    %p191 = scmp.eq.s32.totalorder %s26, 0
    %p192 = por %p190, %p191
    %p193 = scmp.ne.s32.totalorder %s185, %s187
    %p194 = scmp.eq.s32.totalorder %s31, 1
    %p195 = por %p193, %p194
    %p196 = scmp.ne.s32.totalorder %s187, %s188
    %p197 = scmp.eq.s32.totalorder %s31, 0
    %p198 = por %p196, %p197
    %p199 = scmp.ne.s32.totalorder %s187, %s188
    %p200 = scmp.eq.s32.totalorder %s32, 1
    %p201 = por %p199, %p200
    %p203 = scmp.ne.s32.totalorder %s188, %s202
    %p204 = scmp.eq.s32.totalorder %s32, 0
    %p205 = por %p203, %p204
    %s207 = sadd.s32 %s206, 1
    %p210 = scmp.eq.s32.totalorder %s26, 1
    %p211 = scmp.ne.s32.totalorder %s206, %s208
    %p212 = scmp.eq.s32.totalorder %s26, 0
    %p213 = por %p211, %p212
    %p214 = scmp.ne.s32.totalorder %s206, %s208
    %p215 = scmp.eq.s32.totalorder %s31, 1
    %p216 = por %p214, %p215
    %p217 = scmp.ne.s32.totalorder %s208, %s209
    %p218 = scmp.eq.s32.totalorder %s31, 0
    %p219 = por %p217, %p218
    %p220 = scmp.ne.s32.totalorder %s208, %s209
    %p221 = scmp.eq.s32.totalorder %s32, 1
    %p222 = por %p220, %p221
    %p224 = scmp.ne.s32.totalorder %s209, %s223
    %p225 = scmp.eq.s32.totalorder %s32, 0
    %p226 = por %p224, %p225
    %s228 = sadd.s32 %s227, 1
    %p231 = scmp.eq.s32.totalorder %s26, 1
    %p232 = scmp.ne.s32.totalorder %s227, %s229
    %p233 = scmp.eq.s32.totalorder %s26, 0
    %p234 = por %p232, %p233
    %p235 = scmp.ne.s32.totalorder %s227, %s229
    %p236 = scmp.eq.s32.totalorder %s31, 1
    %p237 = por %p235, %p236
    %p238 = scmp.ne.s32.totalorder %s229, %s230
    %p239 = scmp.eq.s32.totalorder %s31, 0
    %p240 = por %p238, %p239
    %p241 = scmp.ne.s32.totalorder %s229, %s230
    %p242 = scmp.eq.s32.totalorder %s32, 1
    %p243 = por %p241, %p242
    %p245 = scmp.ne.s32.totalorder %s230, %s244
    %p246 = scmp.eq.s32.totalorder %s32, 0
    %p247 = por %p245, %p246
    %s249 = sadd.s32 %s248, 1
    %p252 = scmp.eq.s32.totalorder %s26, 1
    %p253 = scmp.ne.s32.totalorder %s248, %s250
    %p254 = scmp.eq.s32.totalorder %s26, 0
    %p255 = por %p253, %p254
    %p256 = scmp.ne.s32.totalorder %s248, %s250
    %p257 = scmp.eq.s32.totalorder %s31, 1
    %p258 = por %p256, %p257
    %p259 = scmp.ne.s32.totalorder %s250, %s251
    %p260 = scmp.eq.s32.totalorder %s31, 0
    %p261 = por %p259, %p260
    %p262 = scmp.ne.s32.totalorder %s250, %s251
    %p263 = scmp.eq.s32.totalorder %s32, 1
    %p264 = por %p262, %p263
    %p266 = scmp.ne.s32.totalorder %s251, %s265
    %p267 = scmp.eq.s32.totalorder %s32, 0
    %p268 = por %p266, %p267
    %s270 = sadd.s32 %s269, 1
    %p273 = scmp.eq.s32.totalorder %s26, 1
    %p274 = scmp.ne.s32.totalorder %s269, %s271
    %p275 = scmp.eq.s32.totalorder %s26, 0
    %p276 = por %p274, %p275
    %p277 = scmp.ne.s32.totalorder %s269, %s271
    %p278 = scmp.eq.s32.totalorder %s31, 1
    %p279 = por %p277, %p278
    %p280 = scmp.ne.s32.totalorder %s271, %s272
    %p281 = scmp.eq.s32.totalorder %s31, 0
    %p282 = por %p280, %p281
    %p283 = scmp.ne.s32.totalorder %s271, %s272
    %p284 = scmp.eq.s32.totalorder %s32, 1
    %p285 = por %p283, %p284
    %p287 = scmp.ne.s32.totalorder %s272, %s286
    %p288 = scmp.eq.s32.totalorder %s32, 0
    %p289 = por %p287, %p288
    %s291 = sadd.s32 %s290, 1
    %p294 = scmp.eq.s32.totalorder %s26, 1
    %p295 = scmp.ne.s32.totalorder %s290, %s292
    %p296 = scmp.eq.s32.totalorder %s26, 0
    %p297 = por %p295, %p296
    %p298 = scmp.ne.s32.totalorder %s290, %s292
    %p299 = scmp.eq.s32.totalorder %s31, 1
    %p300 = por %p298, %p299
    %p301 = scmp.ne.s32.totalorder %s292, %s293
    %p302 = scmp.eq.s32.totalorder %s31, 0
    %p303 = por %p301, %p302
    %p304 = scmp.ne.s32.totalorder %s292, %s293
    %p305 = scmp.eq.s32.totalorder %s32, 1
    %p306 = por %p304, %p305
    %p308 = scmp.ne.s32.totalorder %s293, %s307
    %p309 = scmp.eq.s32.totalorder %s32, 0
    %p310 = por %p308, %p309
    %s312 = sadd.s32 %s311, 1
    %p315 = scmp.eq.s32.totalorder %s26, 1
    %p316 = scmp.ne.s32.totalorder %s311, %s313
    %p317 = scmp.eq.s32.totalorder %s26, 0
    %p318 = por %p316, %p317
    %p319 = scmp.ne.s32.totalorder %s311, %s313
    %p320 = scmp.eq.s32.totalorder %s31, 1
    %p321 = por %p319, %p320
    %p322 = scmp.ne.s32.totalorder %s313, %s314
    %p323 = scmp.eq.s32.totalorder %s31, 0
    %p324 = por %p322, %p323
    %p325 = scmp.ne.s32.totalorder %s313, %s314
    %p326 = scmp.eq.s32.totalorder %s32, 1
    %p327 = por %p325, %p326
    %p329 = scmp.ne.s32.totalorder %s314, %s328
    %p330 = scmp.eq.s32.totalorder %s32, 0
    %p331 = por %p329, %p330
    %s333 = sadd.s32 %s332, 1
    %p336 = scmp.eq.s32.totalorder %s26, 1
    %p337 = scmp.ne.s32.totalorder %s332, %s334
    %p338 = scmp.eq.s32.totalorder %s26, 0
    %p339 = por %p337, %p338
    %p340 = scmp.ne.s32.totalorder %s332, %s334
    %p341 = scmp.eq.s32.totalorder %s31, 1
    %p342 = por %p340, %p341
    %p343 = scmp.ne.s32.totalorder %s334, %s335
    %p344 = scmp.eq.s32.totalorder %s31, 0
    %p345 = por %p343, %p344
    %p346 = scmp.ne.s32.totalorder %s334, %s335
    %p347 = scmp.eq.s32.totalorder %s32, 1
    %p348 = por %p346, %p347
    %p350 = scmp.ne.s32.totalorder %s335, %s349
    %p351 = scmp.eq.s32.totalorder %s32, 0
    %p352 = por %p350, %p351
    %s354 = sadd.s32 %s353, 1
    %p357 = scmp.eq.s32.totalorder %s26, 1
    %p358 = scmp.ne.s32.totalorder %s353, %s355
    %p359 = scmp.eq.s32.totalorder %s26, 0
    %p360 = por %p358, %p359
    %p361 = scmp.ne.s32.totalorder %s353, %s355
    %p362 = scmp.eq.s32.totalorder %s31, 1
    %p363 = por %p361, %p362
    %p364 = scmp.ne.s32.totalorder %s355, %s356
    %p365 = scmp.eq.s32.totalorder %s31, 0
    %p366 = por %p364, %p365
    %p367 = scmp.ne.s32.totalorder %s355, %s356
    %p368 = scmp.eq.s32.totalorder %s32, 1
    %p369 = por %p367, %p368
    %p371 = scmp.ne.s32.totalorder %s356, %s370
    %p372 = scmp.eq.s32.totalorder %s32, 0
    %p373 = por %p371, %p372
    %s375 = sadd.s32 %s374, 1
    %p378 = scmp.eq.s32.totalorder %s26, 1
    %p379 = scmp.ne.s32.totalorder %s374, %s376
    %p380 = scmp.eq.s32.totalorder %s26, 0
    %p381 = por %p379, %p380
    %p382 = scmp.ne.s32.totalorder %s374, %s376
    %p383 = scmp.eq.s32.totalorder %s31, 1
    %p384 = por %p382, %p383
    %p385 = scmp.ne.s32.totalorder %s376, %s377
    %p386 = scmp.eq.s32.totalorder %s31, 0
    %p387 = por %p385, %p386
    %p388 = scmp.ne.s32.totalorder %s376, %s377
    %p389 = scmp.eq.s32.totalorder %s32, 1
    %p390 = por %p388, %p389
    %p392 = scmp.ne.s32.totalorder %s377, %s391
    %p393 = scmp.eq.s32.totalorder %s32, 0
    %p394 = por %p392, %p393
    %s395 = ssub.s32 %s26, %s33
    %p396 = scmp.eq.s32.totalorder %s395, 0
    %s398 = sadd.s32 %s397, 1
    %s399 = scalar_select %p396, %s397, %s398
    %p402 = pneg %p396
    %p403 = scmp.eq.s32.totalorder %s26, 1
    %p404 = por %p402, %p403
    %p405 = scmp.ne.s32.totalorder %s397, %s400
    %p406 = scmp.eq.s32.totalorder %s26, 0
    %p407 = por %p405, %p406
    %p408 = scmp.ne.s32.totalorder %s397, %s400
    %p409 = scmp.eq.s32.totalorder %s31, 1
    %p410 = por %p408, %p409
    %p411 = scmp.ne.s32.totalorder %s400, %s401
    %p412 = scmp.eq.s32.totalorder %s31, 0
    %p413 = por %p411, %p412
    %p414 = scmp.ne.s32.totalorder %s400, %s401
    %p415 = scmp.eq.s32.totalorder %s32, 1
    %p416 = por %p414, %p415
    %p418 = scmp.ne.s32.totalorder %s401, %s417
    %p419 = scmp.eq.s32.totalorder %s32, 0
    %p420 = por %p418, %p419
    %p421 = scmp.le.s32.totalorder 1, %s26
    %p422 = scmp.lt.s32.totalorder %s26, 3
    %p423 = pnand %p421, %p422
    %p424 = pneg %p423
    // Predicated region
    $region9: #{tpu_custom_call.1} parent=5 // pred_check
      _
    $region10: #{tpu_custom_call.1} parent=5 // pred_check_branch
      %426 = sbr.rel (%p423) target = $region12
    $region11: #{tpu_custom_call.1} parent=5 // pred_region
      %s427 = ssub.s32 %s26, 1
      // Predicated region
      $region13: #{tpu_custom_call.1} parent=11 // pred_check
        %p428 = pneg %p177
      $region14: #{tpu_custom_call.1} parent=11 // pred_check_branch
        %430 = sbr.rel (%p428) target = $region16
      $region15: #{tpu_custom_call.1} parent=11 // pred_region
        _
      $region16: #{tpu_custom_call.1} parent=11 // pred_fallthru
        _
      // Predicated region
      $region17: #{tpu_custom_call.1} parent=11 // pred_check
        %p431 = pneg %p198
      $region18: #{tpu_custom_call.1} parent=11 // pred_check_branch
        %433 = sbr.rel (%p431) target = $region20
      $region19: #{tpu_custom_call.1} parent=11 // pred_region
        _
      $region20: #{tpu_custom_call.1} parent=11 // pred_fallthru
        _
      // Predicated region
      $region21: #{tpu_custom_call.1} parent=11 // pred_check
        %p434 = pneg %p219
      $region22: #{tpu_custom_call.1} parent=11 // pred_check_branch
        %436 = sbr.rel (%p434) target = $region24
      $region23: #{tpu_custom_call.1} parent=11 // pred_region
        _
      $region24: #{tpu_custom_call.1} parent=11 // pred_fallthru
        _
      // Predicated region
      $region25: #{tpu_custom_call.1} parent=11 // pred_check
        %p437 = pneg %p240
      $region26: #{tpu_custom_call.1} parent=11 // pred_check_branch
        %439 = sbr.rel (%p437) target = $region28
      $region27: #{tpu_custom_call.1} parent=11 // pred_region
        _
      $region28: #{tpu_custom_call.1} parent=11 // pred_fallthru
        _
      // Predicated region
      $region29: #{tpu_custom_call.1} parent=11 // pred_check
        %p440 = pneg %p261
      $region30: #{tpu_custom_call.1} parent=11 // pred_check_branch
        %442 = sbr.rel (%p440) target = $region32
      $region31: #{tpu_custom_call.1} parent=11 // pred_region
        _
      $region32: #{tpu_custom_call.1} parent=11 // pred_fallthru
        _
      // Predicated region
      $region33: #{tpu_custom_call.1} parent=11 // pred_check
        %p443 = pneg %p282
      $region34: #{tpu_custom_call.1} parent=11 // pred_check_branch
        %445 = sbr.rel (%p443) target = $region36
      $region35: #{tpu_custom_call.1} parent=11 // pred_region
        _
      $region36: #{tpu_custom_call.1} parent=11 // pred_fallthru
        _
      // Predicated region
      $region37: #{tpu_custom_call.1} parent=11 // pred_check
        %p446 = pneg %p303
      $region38: #{tpu_custom_call.1} parent=11 // pred_check_branch
        %448 = sbr.rel (%p446) target = $region40
      $region39: #{tpu_custom_call.1} parent=11 // pred_region
        _
      $region40: #{tpu_custom_call.1} parent=11 // pred_fallthru
        _
      // Predicated region
      $region41: #{tpu_custom_call.1} parent=11 // pred_check
        %p449 = pneg %p324
      $region42: #{tpu_custom_call.1} parent=11 // pred_check_branch
        %451 = sbr.rel (%p449) target = $region44
      $region43: #{tpu_custom_call.1} parent=11 // pred_region
        _
      $region44: #{tpu_custom_call.1} parent=11 // pred_fallthru
        _
      // Predicated region
      $region45: #{tpu_custom_call.1} parent=11 // pred_check
        %p452 = pneg %p345
      $region46: #{tpu_custom_call.1} parent=11 // pred_check_branch
        %454 = sbr.rel (%p452) target = $region48
      $region47: #{tpu_custom_call.1} parent=11 // pred_region
        _
      $region48: #{tpu_custom_call.1} parent=11 // pred_fallthru
        _
      // Predicated region
      $region49: #{tpu_custom_call.1} parent=11 // pred_check
        %p455 = pneg %p366
      $region50: #{tpu_custom_call.1} parent=11 // pred_check_branch
        %457 = sbr.rel (%p455) target = $region52
      $region51: #{tpu_custom_call.1} parent=11 // pred_region
        _
      $region52: #{tpu_custom_call.1} parent=11 // pred_fallthru
        _
      // Predicated region
      $region53: #{tpu_custom_call.1} parent=11 // pred_check
        %p458 = pneg %p387
      $region54: #{tpu_custom_call.1} parent=11 // pred_check_branch
        %460 = sbr.rel (%p458) target = $region56
      $region55: #{tpu_custom_call.1} parent=11 // pred_region
        _
      $region56: #{tpu_custom_call.1} parent=11 // pred_fallthru
        _
    $region12: #{tpu_custom_call.1} parent=5 // pred_fallthru
      _
    %p461 = scmp.lt.s32.totalorder %s26, 2
    // Predicated region
    $region57: #{tpu_custom_call.1} parent=5 // pred_check
      %p462 = pneg %p461
    $region58: #{tpu_custom_call.1} parent=5 // pred_check_branch
      %464 = sbr.rel (%p462) target = $region60
    $region59: #{tpu_custom_call.1} parent=5 // pred_region
      // Predicated region
      $region61: #{tpu_custom_call.1} parent=59 // pred_check
        %p465 = pneg %p46
      $region62: #{tpu_custom_call.1} parent=59 // pred_check_branch
        %467 = sbr.rel (%p465) target = $region64
      $region63: #{tpu_custom_call.1} parent=59 // pred_region
        %p468 = scmp.lt.s32.totalorder %s26, 1
        %s469 = scalar_select %p468, %s26, 1
        %s470 = smul.addr %s469, 2
        %s471 = smul.addr %s470, 8
        %s472 = scalar_lea.vmem %s0, %s471
      $region64: #{tpu_custom_call.1} parent=59 // pred_fallthru
        _
      // Predicated region
      $region65: #{tpu_custom_call.1} parent=59 // pred_check
        %p473 = pneg %p72
      $region66: #{tpu_custom_call.1} parent=59 // pred_check_branch
        %475 = sbr.rel (%p473) target = $region68
      $region67: #{tpu_custom_call.1} parent=59 // pred_region
        %p476 = scmp.lt.s32.totalorder %s26, 1
        %s477 = scalar_select %p476, %s26, 1
        %s478 = smul.addr %s477, 8
        %s479 = scalar_lea.vmem %s1, %s478
      $region68: #{tpu_custom_call.1} parent=59 // pred_fallthru
        _
      // Predicated region
      $region69: #{tpu_custom_call.1} parent=59 // pred_check
        %p480 = pneg %p98
      $region70: #{tpu_custom_call.1} parent=59 // pred_check_branch
        %482 = sbr.rel (%p480) target = $region72
      $region71: #{tpu_custom_call.1} parent=59 // pred_region
        %p483 = scmp.lt.s32.totalorder %s26, 1
        %s484 = scalar_select %p483, %s26, 1
        %s485 = smul.addr %s484, 8
        %s486 = scalar_lea.vmem %s2, %s485
      $region72: #{tpu_custom_call.1} parent=59 // pred_fallthru
        _
      // Predicated region
      $region73: #{tpu_custom_call.1} parent=59 // pred_check
        %p487 = pneg %p124
      $region74: #{tpu_custom_call.1} parent=59 // pred_check_branch
        %489 = sbr.rel (%p487) target = $region76
      $region75: #{tpu_custom_call.1} parent=59 // pred_region
        %p490 = scmp.lt.s32.totalorder %s26, 1
        %s491 = scalar_select %p490, %s26, 1
        %s492 = smul.addr %s491, 2
        %s493 = smul.addr %s492, 8
        %s494 = scalar_lea.vmem %s3, %s493
      $region76: #{tpu_custom_call.1} parent=59 // pred_fallthru
        _
      // Predicated region
      $region77: #{tpu_custom_call.1} parent=59 // pred_check
        %p495 = pneg %p150
      $region78: #{tpu_custom_call.1} parent=59 // pred_check_branch
        %497 = sbr.rel (%p495) target = $region80
      $region79: #{tpu_custom_call.1} parent=59 // pred_region
        %p498 = scmp.lt.s32.totalorder %s26, 1
        %s499 = scalar_select %p498, %s26, 1
        %s500 = smul.addr %s499, 2
        %s501 = smul.addr %s500, 8
        %s502 = scalar_lea.vmem %s4, %s501
      $region80: #{tpu_custom_call.1} parent=59 // pred_fallthru
        _
    $region60: #{tpu_custom_call.1} parent=5 // pred_fallthru
      _
    %p503 = scmp.le.s32.totalorder 1, %s26
    %p504 = scmp.lt.s32.totalorder %s26, 3
    %p505 = pnand %p503, %p504
    %p506 = pneg %p505
    // Predicated region
    $region81: #{tpu_custom_call.1} parent=5 // pred_check
      _
    $region82: #{tpu_custom_call.1} parent=5 // pred_check_branch
      %508 = sbr.rel (%p505) target = $region84
    $region83: #{tpu_custom_call.1} parent=5 // pred_region
      %s509 = ssub.s32 %s26, 1
      %p510 = scmp.lt.s32.totalorder %s31, 1
      %s511 = scalar_select %p510, %s31, 1
      %s512 = smul.addr %s511, 2
      %s513 = smul.addr %s512, 8
      %s514 = scalar_lea.vmem %s0, %s513
      %p515 = pneg %p52
      %p516 = pneg %p49
      %p517 = scmp.lt.s32.totalorder %s31, 1
      %s518 = scalar_select %p517, %s31, 1
      %s519 = smul.addr %s518, 8
      %s520 = scalar_lea.vmem %s1, %s519
      %p521 = pneg %p78
      %p522 = pneg %p75
      %p523 = scmp.lt.s32.totalorder %s31, 1
      %s524 = scalar_select %p523, %s31, 1
      %s525 = smul.addr %s524, 8
      %s526 = scalar_lea.vmem %s2, %s525
      %p527 = pneg %p104
      %p528 = pneg %p101
      %p529 = scmp.lt.s32.totalorder %s31, 1
      %s530 = scalar_select %p529, %s31, 1
      %s531 = smul.addr %s530, 2
      %s532 = smul.addr %s531, 8
      %s533 = scalar_lea.vmem %s3, %s532
      %p534 = pneg %p130
      %p535 = pneg %p127
      %p536 = scmp.lt.s32.totalorder %s31, 1
      %s537 = scalar_select %p536, %s31, 1
      %s538 = smul.addr %s537, 2
      %s539 = smul.addr %s538, 8
      %s540 = scalar_lea.vmem %s4, %s539
      %p541 = pneg %p156
      %p542 = pneg %p153
      %p543 = pneg %p177
      %p544 = pneg %p174
      %p545 = pneg %p198
      %p546 = pneg %p195
      %p547 = pneg %p219
      %p548 = pneg %p216
      %p549 = pneg %p240
      %p550 = pneg %p237
      %p551 = pneg %p261
      %p552 = pneg %p258
      %p553 = pneg %p282
      %p554 = pneg %p279
      %p555 = pneg %p303
      %p556 = pneg %p300
      %p557 = pneg %p324
      %p558 = pneg %p321
      %p559 = pneg %p345
      %p560 = pneg %p342
      %p561 = pneg %p366
      %p562 = pneg %p363
      %p563 = pneg %p387
      %p564 = pneg %p384
      %p565 = pneg %p413
      %p566 = pneg %p410
      %p567 = scmp.lt.s32.totalorder %s31, 1
      %s568 = scalar_select %p567, %s31, 1
      %s569 = smul.addr %s568, 2
      %s570 = smul.addr %s569, 8
      %s571 = scalar_lea.vmem %s16, %s570
      %p572 = scmp.lt.s32.totalorder %s31, 1
      %s573 = scalar_select %p572, %s31, 1
      %s574 = smul.addr %s573, 2
      %s575 = smul.addr %s574, 8
      %s576 = scalar_lea.vmem %s0, %s575
      %p577 = scmp.lt.s32.totalorder %s31, 1
      %s578 = scalar_select %p577, %s31, 1
      %s579 = smul.addr %s578, 8
      %s580 = scalar_lea.vmem %s1, %s579
      %p581 = scmp.lt.s32.totalorder %s31, 1
      %s582 = scalar_select %p581, %s31, 1
      %s583 = smul.addr %s582, 8
      %s584 = scalar_lea.vmem %s2, %s583
      %p585 = scmp.lt.s32.totalorder %s31, 1
      %s586 = scalar_select %p585, %s31, 1
      %s587 = smul.addr %s586, 2
      %s588 = smul.addr %s587, 8
      %s589 = scalar_lea.vmem %s3, %s588
      %p590 = scmp.lt.s32.totalorder %s31, 1
      %s591 = scalar_select %p590, %s31, 1
      %s592 = smul.addr %s591, 2
      %s593 = smul.addr %s592, 8
      %s594 = scalar_lea.vmem %s4, %s593
      %p595 = scmp.lt.s32.totalorder %s31, 1
      %s596 = scalar_select %p595, %s31, 1
      %s597 = smul.addr %s596, 2
      %s598 = smul.addr %s597, 8
      %s599 = scalar_lea.vmem %s16, %s598
      %v600 = vld [vmem:[%s576] sm:$0xff]
      %v601 = vld [vmem:[%s576 + $0x8] sm:$0xff]
      %v602 = vld [vmem:[%s580] sm:$0xff]
      %v603 = vld [vmem:[%s584] sm:$0xff]
      %v604 = vld [vmem:[%s589] sm:$0xff]
      %v605 = vld [vmem:[%s589 + $0x8] sm:$0xf]
      %v606 = vld [vmem:[%s594] sm:$0xff]
      %v607 = vld [vmem:[%s594 + $0x8] sm:$0xff]
      %v608 = vld [vmem:[%s5] sm:$0xff]
      %v609 = vld [vmem:[%s5 + $0x8] sm:$0xff]
      %v610 = vld [vmem:[%s5 + $0x10] sm:$0xff]
      %v611 = vld [vmem:[%s5 + $0x18] sm:$0xff]
      %v612 = vld [vmem:[%s6] sm:$0x1]
      %v613 = vld [vmem:[%s7] sm:$0xff]
      %v614 = vld [vmem:[%s7 + $0x8] sm:$0xff]
      %v615 = vld [vmem:[%s8] sm:$0x1]
      %v616 = vld [vmem:[%s9] sm:$0xff]
      %v617 = vld [vmem:[%s9 + $0x8] sm:$0xff]
      %v618 = vld [vmem:[%s10] sm:$0x1]
      %v619 = vld [vmem:[%s11] sm:$0xff]
      %v620 = vld [vmem:[%s11 + $0x8] sm:$0xff]
      %v621 = vld [vmem:[%s11 + $0x10] sm:$0xff]
      %v622 = vld [vmem:[%s12] sm:$0x1]
      %v623 = vld [vmem:[%s13] sm:$0xff]
      %v624 = vld [vmem:[%s13 + $0x8] sm:$0xff]
      %v625 = vld [vmem:[%s13 + $0x10] sm:$0xff]
      %v626 = vld [vmem:[%s13 + $0x18] sm:$0xff]
      %v627 = vld [vmem:[%s13 + $0x20] sm:$0xff]
      %v628 = vld [vmem:[%s13 + $0x28] sm:$0xff]
      %v629 = vld [vmem:[%s13 + $0x30] sm:$0xff]
      %v630 = vld [vmem:[%s13 + $0x38] sm:$0xff]
      %v631 = vld [vmem:[#allocation2] sm:$0x1]
      %v632 = vld [vmem:[#allocation3] sm:$0x1]
      %v634 = vperm.slane %v612, 0
      %vm636 = vcmask 261120
      %v638 = vsel %vm636, %v600, 0
      %v641 = vsel %vm636, %v601, 0
      %643 = vmatpush.msra.mxu0 0.0
      %644 = vmatpush.msra.mxu0 0.0
      %645 = vmatpush.msra.mxu0 0.0
      %646 = vmatpush.msra.mxu0 0.0
      %647 = vmatpush.msra.mxu0 0.0
      %648 = vmatpush.msra.mxu0 0.0
      %649 = vmatpush.msra.mxu0 0.0
      %650 = vmatpush.msra.mxu0 0.0
      %651 = vmatpush.msra.mxu0 0.0
      %652 = vmatpush.msra.mxu0 0.0
      %653 = vmatpush.msra.mxu0 0.0
      %654 = vmatpush.msra.mxu0 0.0
      %655 = vmatpush.msra.mxu0 %v611
      %656 = vmatpush.msra.mxu0 %v610
      %657 = vmatpush.msra.mxu0 %v609
      %658 = vmatpush.msra.mxu0 %v608
      %659 = vmatmul.f32.gmra.mxu0 %v638
      %v660 = vpop.f32.mrf.mxu0
      %v661 = vadd.f32 %v634, %v660
      %662 = vmatmul.f32.gmra.mxu0 %v641
      %v663 = vpop.f32.mrf.mxu0
      %v664 = vadd.f32 %v634, %v663
      %665 = vdwg.mxu0
      %v667 = vperm.slane %v615, 0
      %vm669 = vcmask 130048
      %v671 = vsel %vm669, %v602, 0
      %673 = vmatpush.msra.mxu0 0.0
      %674 = vmatpush.msra.mxu0 0.0
      %675 = vmatpush.msra.mxu0 0.0
      %676 = vmatpush.msra.mxu0 0.0
      %677 = vmatpush.msra.mxu0 0.0
      %678 = vmatpush.msra.mxu0 0.0
      %679 = vmatpush.msra.mxu0 0.0
      %680 = vmatpush.msra.mxu0 0.0
      %681 = vmatpush.msra.mxu0 0.0
      %682 = vmatpush.msra.mxu0 0.0
      %683 = vmatpush.msra.mxu0 0.0
      %684 = vmatpush.msra.mxu0 0.0
      %685 = vmatpush.msra.mxu0 0.0
      %686 = vmatpush.msra.mxu0 0.0
      %687 = vmatpush.msra.mxu0 %v614
      %688 = vmatpush.msra.mxu0 %v613
      %689 = vmatmul.f32.gmra.mxu0 %v671
      %v690 = vpop.f32.mrf.mxu0
      %v691 = vadd.f32 %v667, %v690
      %692 = vdwg.mxu0
      %v694 = vperm.slane %v618, 0
      %v697 = vsel %vm669, %v603, 0
      %699 = vmatpush.msra.mxu0 0.0
      %700 = vmatpush.msra.mxu0 0.0
      %701 = vmatpush.msra.mxu0 0.0
      %702 = vmatpush.msra.mxu0 0.0
      %703 = vmatpush.msra.mxu0 0.0
      %704 = vmatpush.msra.mxu0 0.0
      %705 = vmatpush.msra.mxu0 0.0
      %706 = vmatpush.msra.mxu0 0.0
      %707 = vmatpush.msra.mxu0 0.0
      %708 = vmatpush.msra.mxu0 0.0
      %709 = vmatpush.msra.mxu0 0.0
      %710 = vmatpush.msra.mxu0 0.0
      %711 = vmatpush.msra.mxu0 0.0
      %712 = vmatpush.msra.mxu0 0.0
      %713 = vmatpush.msra.mxu0 %v617
      %714 = vmatpush.msra.mxu0 %v616
      %715 = vmatmul.f32.gmra.mxu0 %v697
      %v716 = vpop.f32.mrf.mxu0
      %v717 = vadd.f32 %v694, %v716
      %718 = vdwg.mxu0
      %v720 = vperm.slane %v622, 0
      %vm722 = vcmask 195584
      %v724 = vsel %vm722, %v604, 0
      %v727 = vsel %vm722, %v605, 0
      %729 = vmatpush.msra.mxu0 0.0
      %730 = vmatpush.msra.mxu0 0.0
      %731 = vmatpush.msra.mxu0 0.0
      %732 = vmatpush.msra.mxu0 0.0
      %733 = vmatpush.msra.mxu0 0.0
      %734 = vmatpush.msra.mxu0 0.0
      %735 = vmatpush.msra.mxu0 0.0
      %736 = vmatpush.msra.mxu0 0.0
      %737 = vmatpush.msra.mxu0 0.0
      %738 = vmatpush.msra.mxu0 0.0
      %739 = vmatpush.msra.mxu0 0.0
      %740 = vmatpush.msra.mxu0 0.0
      %741 = vmatpush.msra.mxu0 0.0
      %742 = vmatpush.msra.mxu0 %v621
      %743 = vmatpush.msra.mxu0 %v620
      %744 = vmatpush.msra.mxu0 %v619
      %745 = vmatmul.f32.gmra.mxu0 %v724
      %v746 = vpop.f32.mrf.mxu0
      %v747 = vadd.f32 %v720, %v746
      %748 = vmatmul.f32.gmra.mxu0 %v727
      %v749 = vpop.f32.mrf.mxu0
      %v750 = vadd.f32 %v720, %v749
      %751 = vdwg.mxu0
      %vm752 = vcmask 64512
      %v754 = vsel %vm752, %v661, 0
      %v757 = vsel %vm752, %v664, 0
      %v760 = vsel %vm752, %v691, 0
      %762 = vmatpush.xpose.msra.mxu0 0.0
      %763 = vmatpush.xpose.msra.mxu0 0.0
      %764 = vmatpush.xpose.msra.mxu0 0.0
      %765 = vmatpush.xpose.msra.mxu0 0.0
      %766 = vmatpush.xpose.msra.mxu0 0.0
      %767 = vmatpush.xpose.msra.mxu0 0.0
      %768 = vmatpush.xpose.msra.mxu0 0.0
      %769 = vmatpush.xpose.msra.mxu0 0.0
      %770 = vmatpush.xpose.msra.mxu0 0.0
      %771 = vmatpush.xpose.msra.mxu0 0.0
      %772 = vmatpush.xpose.msra.mxu0 0.0
      %773 = vmatpush.xpose.msra.mxu0 0.0
      %774 = vmatpush.xpose.msra.mxu0 0.0
      %775 = vmatpush.xpose.msra.mxu0 0.0
      %776 = vmatpush.xpose.msra.mxu0 0.0
      %777 = vmatpush.xpose.msra.mxu0 %v760
      %778 = vmatmul.f32.gmra.mxu0 %v754
      %v779 = vpop.f32.mrf.mxu0
      %v780 = vadd.f32 0.0, %v779
      %781 = vmatmul.f32.gmra.mxu0 %v757
      %v782 = vpop.f32.mrf.mxu0
      %v783 = vadd.f32 0.0, %v782
      %784 = vdwg.mxu0
      %v785 = vsel %vm752, %v780, -inf
      %786 = vmax.xlane.f32.xlu0 %v785
      %v787 = vpop.xlane.xlu0 %786
      %v788 = vsel %vm752, %v783, -inf
      %789 = vmax.xlane.f32.xlu0 %v788
      %v790 = vpop.xlane.xlu0 %789
      %v791 = vsub.f32 %v780, %v787
      %v792 = vsub.f32 %v783, %v790
      %v793 = vmul.f32 %v791, 1.442695
      %v794 = vpow.pop %v793
      %v795 = vmul.f32 %v792, 1.442695
      %v796 = vpow.pop %v795
      %v797 = vsel %vm752, %v794, 0.0
      %798 = vadd.xlane.f32.xlu0 %v797
      %v799 = vpop.xlane.xlu0 %798
      %v800 = vsel %vm752, %v796, 0.0
      %801 = vadd.xlane.f32.xlu0 %v800
      %v802 = vpop.xlane.xlu0 %801
      %v803 = vrcp.pop %v799
      %v804 = vmul.f32 %v799, %v803
      %v805 = vsub.f32 1.0, %v804
      %v806 = vmul.f32 %v803, %v805
      %v807 = vadd.f32 %v803, %v806
      %vm808 = vweird.f32 %v799
      %vm809 = vweird.f32 %v803
      %vm810 = vmor %vm808, %vm809
      %v811 = vsel %vm810, %v803, %v807
      %v812 = vand.u32 2147483647, %v799
      %vm813 = vcmp.eq.f32.partialorder %v812, 8.507059e+37
      %v814 = vand.u32 %v799, 2147483648
      %v815 = vor.u32 1.1754944e-38, %v814
      %v816 = vsel %vm813, %v815, %v811
      %v817 = vrcp.pop %v802
      %v818 = vmul.f32 %v802, %v817
      %v819 = vsub.f32 1.0, %v818
      %v820 = vmul.f32 %v817, %v819
      %v821 = vadd.f32 %v817, %v820
      %vm822 = vweird.f32 %v802
      %vm823 = vweird.f32 %v817
      %vm824 = vmor %vm822, %vm823
      %v825 = vsel %vm824, %v817, %v821
      %v826 = vand.u32 2147483647, %v802
      %vm827 = vcmp.eq.f32.partialorder %v826, 8.507059e+37
      %v828 = vand.u32 %v802, 2147483648
      %v829 = vor.u32 1.1754944e-38, %v828
      %v830 = vsel %vm827, %v829, %v825
      %v831 = vmul.f32 %v794, %v816
      %v832 = vmul.f32 %v796, %v830
      %v834 = vsel %vm752, %v831, 0
      %v837 = vsel %vm752, %v832, 0
      %839 = vmatpush.msra.mxu0 0.0
      %840 = vmatpush.msra.mxu0 0.0
      %841 = vmatpush.msra.mxu0 0.0
      %842 = vmatpush.msra.mxu0 0.0
      %843 = vmatpush.msra.mxu0 0.0
      %844 = vmatpush.msra.mxu0 0.0
      %845 = vmatpush.msra.mxu0 0.0
      %846 = vmatpush.msra.mxu0 0.0
      %847 = vmatpush.msra.mxu0 0.0
      %848 = vmatpush.msra.mxu0 0.0
      %849 = vmatpush.msra.mxu0 0.0
      %850 = vmatpush.msra.mxu0 0.0
      %851 = vmatpush.msra.mxu0 0.0
      %852 = vmatpush.msra.mxu0 0.0
      %853 = vmatpush.msra.mxu0 0.0
      %854 = vmatpush.msra.mxu0 %v717
      %855 = vmatmul.f32.gmra.mxu0 %v834
      %v856 = vpop.f32.mrf.mxu0
      %v857 = vadd.f32 0.0, %v856
      %858 = vmatmul.f32.gmra.mxu0 %v837
      %v859 = vpop.f32.mrf.mxu0
      %v860 = vadd.f32 0.0, %v859
      %861 = vdwg.mxu0
      %862 = vrot.lane.b32.xlu0 %v661, 120
      %v863 = vpop.permute.xlu0 %862
      %864 = vrot.lane.b32.xlu0 %v664, 120
      %v865 = vpop.permute.xlu0 %864
      %866 = vrot.lane.b32.xlu0 %v691, 120
      %v867 = vpop.permute.xlu0 %866
      %v868 = vsel %vm752, %v863, 0
      %v870 = vsel %vm752, %v865, 0
      %v872 = vsel %vm752, %v867, 0
      %874 = vmatpush.xpose.msra.mxu0 0.0
      %875 = vmatpush.xpose.msra.mxu0 0.0
      %876 = vmatpush.xpose.msra.mxu0 0.0
      %877 = vmatpush.xpose.msra.mxu0 0.0
      %878 = vmatpush.xpose.msra.mxu0 0.0
      %879 = vmatpush.xpose.msra.mxu0 0.0
      %880 = vmatpush.xpose.msra.mxu0 0.0
      %881 = vmatpush.xpose.msra.mxu0 0.0
      %882 = vmatpush.xpose.msra.mxu0 0.0
      %883 = vmatpush.xpose.msra.mxu0 0.0
      %884 = vmatpush.xpose.msra.mxu0 0.0
      %885 = vmatpush.xpose.msra.mxu0 0.0
      %886 = vmatpush.xpose.msra.mxu0 0.0
      %887 = vmatpush.xpose.msra.mxu0 0.0
      %888 = vmatpush.xpose.msra.mxu0 0.0
      %889 = vmatpush.xpose.msra.mxu0 %v872
      %890 = vmatmul.f32.gmra.mxu0 %v868
      %v891 = vpop.f32.mrf.mxu0
      %v892 = vadd.f32 0.0, %v891
      %893 = vmatmul.f32.gmra.mxu0 %v870
      %v894 = vpop.f32.mrf.mxu0
      %v895 = vadd.f32 0.0, %v894
      %896 = vdwg.mxu0
      %v897 = vsel %vm752, %v892, -inf
      %898 = vmax.xlane.f32.xlu0 %v897
      %v899 = vpop.xlane.xlu0 %898
      %v900 = vsel %vm752, %v895, -inf
      %901 = vmax.xlane.f32.xlu0 %v900
      %v902 = vpop.xlane.xlu0 %901
      %v903 = vsub.f32 %v892, %v899
      %v904 = vsub.f32 %v895, %v902
      %v905 = vmul.f32 %v903, 1.442695
      %v906 = vpow.pop %v905
      %v907 = vmul.f32 %v904, 1.442695
      %v908 = vpow.pop %v907
      %v909 = vsel %vm752, %v906, 0.0
      %910 = vadd.xlane.f32.xlu0 %v909
      %v911 = vpop.xlane.xlu0 %910
      %v912 = vsel %vm752, %v908, 0.0
      %913 = vadd.xlane.f32.xlu0 %v912
      %v914 = vpop.xlane.xlu0 %913
      %v915 = vrcp.pop %v911
      %v916 = vmul.f32 %v911, %v915
      %v917 = vsub.f32 1.0, %v916
      %v918 = vmul.f32 %v915, %v917
      %v919 = vadd.f32 %v915, %v918
      %vm920 = vweird.f32 %v911
      %vm921 = vweird.f32 %v915
      %vm922 = vmor %vm920, %vm921
      %v923 = vsel %vm922, %v915, %v919
      %v924 = vand.u32 2147483647, %v911
      %vm925 = vcmp.eq.f32.partialorder %v924, 8.507059e+37
      %v926 = vand.u32 %v911, 2147483648
      %v927 = vor.u32 1.1754944e-38, %v926
      %v928 = vsel %vm925, %v927, %v923
      %v929 = vrcp.pop %v914
      %v930 = vmul.f32 %v914, %v929
      %v931 = vsub.f32 1.0, %v930
      %v932 = vmul.f32 %v929, %v931
      %v933 = vadd.f32 %v929, %v932
      %vm934 = vweird.f32 %v914
      %vm935 = vweird.f32 %v929
      %vm936 = vmor %vm934, %vm935
      %v937 = vsel %vm936, %v929, %v933
      %v938 = vand.u32 2147483647, %v914
      %vm939 = vcmp.eq.f32.partialorder %v938, 8.507059e+37
      %v940 = vand.u32 %v914, 2147483648
      %v941 = vor.u32 1.1754944e-38, %v940
      %v942 = vsel %vm939, %v941, %v937
      %v943 = vmul.f32 %v906, %v928
      %v944 = vmul.f32 %v908, %v942
      %946 = vrot.lane.b32.xlu0 %v717, 120
      %v947 = vpop.permute.xlu0 %946
      %v950 = vsel %vm752, %v943, 0
      %v953 = vsel %vm752, %v944, 0
      %955 = vmatpush.msra.mxu0 0.0
      %956 = vmatpush.msra.mxu0 0.0
      %957 = vmatpush.msra.mxu0 0.0
      %958 = vmatpush.msra.mxu0 0.0
      %959 = vmatpush.msra.mxu0 0.0
      %960 = vmatpush.msra.mxu0 0.0
      %961 = vmatpush.msra.mxu0 0.0
      %962 = vmatpush.msra.mxu0 0.0
      %963 = vmatpush.msra.mxu0 0.0
      %964 = vmatpush.msra.mxu0 0.0
      %965 = vmatpush.msra.mxu0 0.0
      %966 = vmatpush.msra.mxu0 0.0
      %967 = vmatpush.msra.mxu0 0.0
      %968 = vmatpush.msra.mxu0 0.0
      %969 = vmatpush.msra.mxu0 0.0
      %970 = vmatpush.msra.mxu0 %v947
      %971 = vmatmul.f32.gmra.mxu0 %v950
      %v972 = vpop.f32.mrf.mxu0
      %v973 = vadd.f32 0.0, %v972
      %974 = vmatmul.f32.gmra.mxu0 %v953
      %v975 = vpop.f32.mrf.mxu0
      %v976 = vadd.f32 0.0, %v975
      %977 = vdwg.mxu0
      %978 = vrot.lane.b32.xlu0 %v661, 112
      %v979 = vpop.permute.xlu0 %978
      %980 = vrot.lane.b32.xlu0 %v664, 112
      %v981 = vpop.permute.xlu0 %980
      %982 = vrot.lane.b32.xlu0 %v691, 112
      %v983 = vpop.permute.xlu0 %982
      %v984 = vsel %vm752, %v979, 0
      %v986 = vsel %vm752, %v981, 0
      %v988 = vsel %vm752, %v983, 0
      %990 = vmatpush.xpose.msra.mxu0 0.0
      %991 = vmatpush.xpose.msra.mxu0 0.0
      %992 = vmatpush.xpose.msra.mxu0 0.0
      %993 = vmatpush.xpose.msra.mxu0 0.0
      %994 = vmatpush.xpose.msra.mxu0 0.0
      %995 = vmatpush.xpose.msra.mxu0 0.0
      %996 = vmatpush.xpose.msra.mxu0 0.0
      %997 = vmatpush.xpose.msra.mxu0 0.0
      %998 = vmatpush.xpose.msra.mxu0 0.0
      %999 = vmatpush.xpose.msra.mxu0 0.0
      %1000 = vmatpush.xpose.msra.mxu0 0.0
      %1001 = vmatpush.xpose.msra.mxu0 0.0
      %1002 = vmatpush.xpose.msra.mxu0 0.0
      %1003 = vmatpush.xpose.msra.mxu0 0.0
      %1004 = vmatpush.xpose.msra.mxu0 0.0
      %1005 = vmatpush.xpose.msra.mxu0 %v988
      %1006 = vmatmul.f32.gmra.mxu0 %v984
      %v1007 = vpop.f32.mrf.mxu0
      %v1008 = vadd.f32 0.0, %v1007
      %1009 = vmatmul.f32.gmra.mxu0 %v986
      %v1010 = vpop.f32.mrf.mxu0
      %v1011 = vadd.f32 0.0, %v1010
      %1012 = vdwg.mxu0
      %v1013 = vsel %vm752, %v1008, -inf
      %1014 = vmax.xlane.f32.xlu0 %v1013
      %v1015 = vpop.xlane.xlu0 %1014
      %v1016 = vsel %vm752, %v1011, -inf
      %1017 = vmax.xlane.f32.xlu0 %v1016
      %v1018 = vpop.xlane.xlu0 %1017
      %v1019 = vsub.f32 %v1008, %v1015
      %v1020 = vsub.f32 %v1011, %v1018
      %v1021 = vmul.f32 %v1019, 1.442695
      %v1022 = vpow.pop %v1021
      %v1023 = vmul.f32 %v1020, 1.442695
      %v1024 = vpow.pop %v1023
      %v1025 = vsel %vm752, %v1022, 0.0
      %1026 = vadd.xlane.f32.xlu0 %v1025
      %v1027 = vpop.xlane.xlu0 %1026
      %v1028 = vsel %vm752, %v1024, 0.0
      %1029 = vadd.xlane.f32.xlu0 %v1028
      %v1030 = vpop.xlane.xlu0 %1029
      %v1031 = vrcp.pop %v1027
      %v1032 = vmul.f32 %v1027, %v1031
      %v1033 = vsub.f32 1.0, %v1032
      %v1034 = vmul.f32 %v1031, %v1033
      %v1035 = vadd.f32 %v1031, %v1034
      %vm1036 = vweird.f32 %v1027
      %vm1037 = vweird.f32 %v1031
      %vm1038 = vmor %vm1036, %vm1037
      %v1039 = vsel %vm1038, %v1031, %v1035
      %v1040 = vand.u32 2147483647, %v1027
      %vm1041 = vcmp.eq.f32.partialorder %v1040, 8.507059e+37
      %v1042 = vand.u32 %v1027, 2147483648
      %v1043 = vor.u32 1.1754944e-38, %v1042
      %v1044 = vsel %vm1041, %v1043, %v1039
      %v1045 = vrcp.pop %v1030
      %v1046 = vmul.f32 %v1030, %v1045
      %v1047 = vsub.f32 1.0, %v1046
      %v1048 = vmul.f32 %v1045, %v1047
      %v1049 = vadd.f32 %v1045, %v1048
      %vm1050 = vweird.f32 %v1030
      %vm1051 = vweird.f32 %v1045
      %vm1052 = vmor %vm1050, %vm1051
      %v1053 = vsel %vm1052, %v1045, %v1049
      %v1054 = vand.u32 2147483647, %v1030
      %vm1055 = vcmp.eq.f32.partialorder %v1054, 8.507059e+37
      %v1056 = vand.u32 %v1030, 2147483648
      %v1057 = vor.u32 1.1754944e-38, %v1056
      %v1058 = vsel %vm1055, %v1057, %v1053
      %v1059 = vmul.f32 %v1022, %v1044
      %v1060 = vmul.f32 %v1024, %v1058
      %1061 = vrot.lane.b32.xlu0 %v717, 112
      %v1062 = vpop.permute.xlu0 %1061
      %v1065 = vsel %vm752, %v1059, 0
      %v1068 = vsel %vm752, %v1060, 0
      %1070 = vmatpush.msra.mxu0 0.0
      %1071 = vmatpush.msra.mxu0 0.0
      %1072 = vmatpush.msra.mxu0 0.0
      %1073 = vmatpush.msra.mxu0 0.0
      %1074 = vmatpush.msra.mxu0 0.0
      %1075 = vmatpush.msra.mxu0 0.0
      %1076 = vmatpush.msra.mxu0 0.0
      %1077 = vmatpush.msra.mxu0 0.0
      %1078 = vmatpush.msra.mxu0 0.0
      %1079 = vmatpush.msra.mxu0 0.0
      %1080 = vmatpush.msra.mxu0 0.0
      %1081 = vmatpush.msra.mxu0 0.0
      %1082 = vmatpush.msra.mxu0 0.0
      %1083 = vmatpush.msra.mxu0 0.0
      %1084 = vmatpush.msra.mxu0 0.0
      %1085 = vmatpush.msra.mxu0 %v1062
      %1086 = vmatmul.f32.gmra.mxu0 %v1065
      %v1087 = vpop.f32.mrf.mxu0
      %v1088 = vadd.f32 0.0, %v1087
      %1089 = vmatmul.f32.gmra.mxu0 %v1068
      %v1090 = vpop.f32.mrf.mxu0
      %v1091 = vadd.f32 0.0, %v1090
      %1092 = vdwg.mxu0
      %1093 = vrot.lane.b32.xlu0 %v661, 104
      %v1094 = vpop.permute.xlu0 %1093
      %1095 = vrot.lane.b32.xlu0 %v664, 104
      %v1096 = vpop.permute.xlu0 %1095
      %1097 = vrot.lane.b32.xlu0 %v691, 104
      %v1098 = vpop.permute.xlu0 %1097
      %v1099 = vsel %vm752, %v1094, 0
      %v1101 = vsel %vm752, %v1096, 0
      %v1103 = vsel %vm752, %v1098, 0
      %1105 = vmatpush.xpose.msra.mxu0 0.0
      %1106 = vmatpush.xpose.msra.mxu0 0.0
      %1107 = vmatpush.xpose.msra.mxu0 0.0
      %1108 = vmatpush.xpose.msra.mxu0 0.0
      %1109 = vmatpush.xpose.msra.mxu0 0.0
      %1110 = vmatpush.xpose.msra.mxu0 0.0
      %1111 = vmatpush.xpose.msra.mxu0 0.0
      %1112 = vmatpush.xpose.msra.mxu0 0.0
      %1113 = vmatpush.xpose.msra.mxu0 0.0
      %1114 = vmatpush.xpose.msra.mxu0 0.0
      %1115 = vmatpush.xpose.msra.mxu0 0.0
      %1116 = vmatpush.xpose.msra.mxu0 0.0
      %1117 = vmatpush.xpose.msra.mxu0 0.0
      %1118 = vmatpush.xpose.msra.mxu0 0.0
      %1119 = vmatpush.xpose.msra.mxu0 0.0
      %1120 = vmatpush.xpose.msra.mxu0 %v1103
      %1121 = vmatmul.f32.gmra.mxu0 %v1099
      %v1122 = vpop.f32.mrf.mxu0
      %v1123 = vadd.f32 0.0, %v1122
      %1124 = vmatmul.f32.gmra.mxu0 %v1101
      %v1125 = vpop.f32.mrf.mxu0
      %v1126 = vadd.f32 0.0, %v1125
      %1127 = vdwg.mxu0
      %v1128 = vsel %vm752, %v1123, -inf
      %1129 = vmax.xlane.f32.xlu0 %v1128
      %v1130 = vpop.xlane.xlu0 %1129
      %v1131 = vsel %vm752, %v1126, -inf
      %1132 = vmax.xlane.f32.xlu0 %v1131
      %v1133 = vpop.xlane.xlu0 %1132
      %v1134 = vsub.f32 %v1123, %v1130
      %v1135 = vsub.f32 %v1126, %v1133
      %v1136 = vmul.f32 %v1134, 1.442695
      %v1137 = vpow.pop %v1136
      %v1138 = vmul.f32 %v1135, 1.442695
      %v1139 = vpow.pop %v1138
      %v1140 = vsel %vm752, %v1137, 0.0
      %1141 = vadd.xlane.f32.xlu0 %v1140
      %v1142 = vpop.xlane.xlu0 %1141
      %v1143 = vsel %vm752, %v1139, 0.0
      %1144 = vadd.xlane.f32.xlu0 %v1143
      %v1145 = vpop.xlane.xlu0 %1144
      %v1146 = vrcp.pop %v1142
      %v1147 = vmul.f32 %v1142, %v1146
      %v1148 = vsub.f32 1.0, %v1147
      %v1149 = vmul.f32 %v1146, %v1148
      %v1150 = vadd.f32 %v1146, %v1149
      %vm1151 = vweird.f32 %v1142
      %vm1152 = vweird.f32 %v1146
      %vm1153 = vmor %vm1151, %vm1152
      %v1154 = vsel %vm1153, %v1146, %v1150
      %v1155 = vand.u32 2147483647, %v1142
      %vm1156 = vcmp.eq.f32.partialorder %v1155, 8.507059e+37
      %v1157 = vand.u32 %v1142, 2147483648
      %v1158 = vor.u32 1.1754944e-38, %v1157
      %v1159 = vsel %vm1156, %v1158, %v1154
      %v1160 = vrcp.pop %v1145
      %v1161 = vmul.f32 %v1145, %v1160
      %v1162 = vsub.f32 1.0, %v1161
      %v1163 = vmul.f32 %v1160, %v1162
      %v1164 = vadd.f32 %v1160, %v1163
      %vm1165 = vweird.f32 %v1145
      %vm1166 = vweird.f32 %v1160
      %vm1167 = vmor %vm1165, %vm1166
      %v1168 = vsel %vm1167, %v1160, %v1164
      %v1169 = vand.u32 2147483647, %v1145
      %vm1170 = vcmp.eq.f32.partialorder %v1169, 8.507059e+37
      %v1171 = vand.u32 %v1145, 2147483648
      %v1172 = vor.u32 1.1754944e-38, %v1171
      %v1173 = vsel %vm1170, %v1172, %v1168
      %v1174 = vmul.f32 %v1137, %v1159
      %v1175 = vmul.f32 %v1139, %v1173
      %1176 = vrot.lane.b32.xlu0 %v717, 104
      %v1177 = vpop.permute.xlu0 %1176
      %v1180 = vsel %vm752, %v1174, 0
      %v1183 = vsel %vm752, %v1175, 0
      %1185 = vmatpush.msra.mxu0 0.0
      %1186 = vmatpush.msra.mxu0 0.0
      %1187 = vmatpush.msra.mxu0 0.0
      %1188 = vmatpush.msra.mxu0 0.0
      %1189 = vmatpush.msra.mxu0 0.0
      %1190 = vmatpush.msra.mxu0 0.0
      %1191 = vmatpush.msra.mxu0 0.0
      %1192 = vmatpush.msra.mxu0 0.0
      %1193 = vmatpush.msra.mxu0 0.0
      %1194 = vmatpush.msra.mxu0 0.0
      %1195 = vmatpush.msra.mxu0 0.0
      %1196 = vmatpush.msra.mxu0 0.0
      %1197 = vmatpush.msra.mxu0 0.0
      %1198 = vmatpush.msra.mxu0 0.0
      %1199 = vmatpush.msra.mxu0 0.0
      %1200 = vmatpush.msra.mxu0 %v1177
      %1201 = vmatmul.f32.gmra.mxu0 %v1180
      %v1202 = vpop.f32.mrf.mxu0
      %v1203 = vadd.f32 0.0, %v1202
      %1204 = vmatmul.f32.gmra.mxu0 %v1183
      %v1205 = vpop.f32.mrf.mxu0
      %v1206 = vadd.f32 0.0, %v1205
      %1207 = vdwg.mxu0
      %1210 = vrot.lane.b32.xlu0 %v973, 8
      %v1211 = vpop.permute.xlu0 %1210
      %1212 = vrot.lane.b32.xlu0 %v976, 8
      %v1213 = vpop.permute.xlu0 %1212
      %1218 = vrot.lane.b32.xlu0 %v1088, 16
      %v1219 = vpop.permute.xlu0 %1218
      %1220 = vrot.lane.b32.xlu0 %v1091, 16
      %v1221 = vpop.permute.xlu0 %1220
      %1226 = vrot.lane.b32.xlu0 %v1203, 24
      %v1227 = vpop.permute.xlu0 %1226
      %1228 = vrot.lane.b32.xlu0 %v1206, 24
      %v1229 = vpop.permute.xlu0 %1228
      %v1232 = vsel %vm752, %v857, %v1211
      %v1233 = vsel %vm752, %v860, %v1213
      %v1234 = vsel %vm669, %v1232, %v1219
      %v1235 = vsel %vm669, %v1233, %v1221
      %v1236 = vsel %vm722, %v1234, %v1227
      %v1237 = vsel %vm722, %v1235, %v1229
      %1238 = vrot.lane.b32.xlu0 %v661, 96
      %v1239 = vpop.permute.xlu0 %1238
      %1240 = vrot.lane.b32.xlu0 %v664, 96
      %v1241 = vpop.permute.xlu0 %1240
      %v1242 = vsel %vm752, %v1239, 0
      %v1244 = vsel %vm752, %v1241, 0
      %v1247 = vsel %vm752, %v747, 0
      %v1250 = vsel %vm752, %v750, 0
      %1252 = vmatpush.xpose.msra.mxu0 0.0
      %1253 = vmatpush.xpose.msra.mxu0 0.0
      %1254 = vmatpush.xpose.msra.mxu0 0.0
      %1255 = vmatpush.xpose.msra.mxu0 0.0
      %1256 = vmatpush.xpose.msra.mxu0 0.0
      %1257 = vmatpush.xpose.msra.mxu0 0.0
      %1258 = vmatpush.xpose.msra.mxu0 0.0
      %1259 = vmatpush.xpose.msra.mxu0 0.0
      %1260 = vmatpush.xpose.msra.mxu0 0.0
      %1261 = vmatpush.xpose.msra.mxu0 0.0
      %1262 = vmatpush.xpose.msra.mxu0 0.0
      %1263 = vmatpush.xpose.msra.mxu0 0.0
      %1264 = vmatpush.xpose.msra.mxu0 0.0
      %1265 = vmatpush.xpose.msra.mxu0 0.0
      %1266 = vmatpush.xpose.msra.mxu0 %v1250
      %1267 = vmatpush.xpose.msra.mxu0 %v1247
      %1268 = vmatmul.f32.gmra.mxu0 %v1242
      %v1269 = vpop.f32.mrf.mxu0
      %v1270 = vadd.f32 0.0, %v1269
      %1271 = vmatmul.f32.gmra.mxu0 %v1244
      %v1272 = vpop.f32.mrf.mxu0
      %v1273 = vadd.f32 0.0, %v1272
      %1274 = vdwg.mxu0
      %vm1275 = vcmp.gt.f32.partialorder %v606, 0.0
      %vm1276 = vcmp.gt.f32.partialorder %v607, 0.0
      %v1277 = vsel %vm1275, %v1270, -1e+30
      %v1278 = vsel %vm1276, %v1273, -1e+30
      %vm1279 = vcmask 97280
      %v1280 = vsel %vm1279, %v1277, -inf
      %1281 = vmax.xlane.f32.xlu0 %v1280
      %v1282 = vpop.xlane.xlu0 %1281
      %v1283 = vsel %vm1279, %v1278, -inf
      %1284 = vmax.xlane.f32.xlu0 %v1283
      %v1285 = vpop.xlane.xlu0 %1284
      %v1286 = vsub.f32 %v1277, %v1282
      %v1287 = vsub.f32 %v1278, %v1285
      %v1288 = vmul.f32 %v1286, 1.442695
      %v1289 = vpow.pop %v1288
      %v1290 = vmul.f32 %v1287, 1.442695
      %v1291 = vpow.pop %v1290
      %v1292 = vsel %vm1279, %v1289, 0.0
      %1293 = vadd.xlane.f32.xlu0 %v1292
      %v1294 = vpop.xlane.xlu0 %1293
      %v1295 = vsel %vm1279, %v1291, 0.0
      %1296 = vadd.xlane.f32.xlu0 %v1295
      %v1297 = vpop.xlane.xlu0 %1296
      %v1298 = vrcp.pop %v1294
      %v1299 = vmul.f32 %v1294, %v1298
      %v1300 = vsub.f32 1.0, %v1299
      %v1301 = vmul.f32 %v1298, %v1300
      %v1302 = vadd.f32 %v1298, %v1301
      %vm1303 = vweird.f32 %v1294
      %vm1304 = vweird.f32 %v1298
      %vm1305 = vmor %vm1303, %vm1304
      %v1306 = vsel %vm1305, %v1298, %v1302
      %v1307 = vand.u32 2147483647, %v1294
      %vm1308 = vcmp.eq.f32.partialorder %v1307, 8.507059e+37
      %v1309 = vand.u32 %v1294, 2147483648
      %v1310 = vor.u32 1.1754944e-38, %v1309
      %v1311 = vsel %vm1308, %v1310, %v1306
      %v1312 = vrcp.pop %v1297
      %v1313 = vmul.f32 %v1297, %v1312
      %v1314 = vsub.f32 1.0, %v1313
      %v1315 = vmul.f32 %v1312, %v1314
      %v1316 = vadd.f32 %v1312, %v1315
      %vm1317 = vweird.f32 %v1297
      %vm1318 = vweird.f32 %v1312
      %vm1319 = vmor %vm1317, %vm1318
      %v1320 = vsel %vm1319, %v1312, %v1316
      %v1321 = vand.u32 2147483647, %v1297
      %vm1322 = vcmp.eq.f32.partialorder %v1321, 8.507059e+37
      %v1323 = vand.u32 %v1297, 2147483648
      %v1324 = vor.u32 1.1754944e-38, %v1323
      %v1325 = vsel %vm1322, %v1324, %v1320
      %v1326 = vmul.f32 %v1289, %v1311
      %v1327 = vmul.f32 %v1291, %v1325
      %1328 = vrot.lane.b32.xlu0 %v747, 96
      %v1329 = vpop.permute.xlu0 %1328
      %1330 = vrot.lane.b32.xlu0 %v750, 96
      %v1331 = vpop.permute.xlu0 %1330
      %v1334 = vsel %vm1279, %v1326, 0
      %v1337 = vsel %vm1279, %v1327, 0
      %vm1339 = vcmask 1043456
      %v1340 = vsel %vm1339, %v1331, 0
      %1342 = vmatpush.msra.mxu0 0.0
      %1343 = vmatpush.msra.mxu0 0.0
      %1344 = vmatpush.msra.mxu0 0.0
      %1345 = vmatpush.msra.mxu0 0.0
      %1346 = vmatpush.msra.mxu0 0.0
      %1347 = vmatpush.msra.mxu0 0.0
      %1348 = vmatpush.msra.mxu0 0.0
      %1349 = vmatpush.msra.mxu0 0.0
      %1350 = vmatpush.msra.mxu0 0.0
      %1351 = vmatpush.msra.mxu0 0.0
      %1352 = vmatpush.msra.mxu0 0.0
      %1353 = vmatpush.msra.mxu0 0.0
      %1354 = vmatpush.msra.mxu0 0.0
      %1355 = vmatpush.msra.mxu0 0.0
      %1356 = vmatpush.msra.mxu0 %v1340
      %1357 = vmatpush.msra.mxu0 %v1329
      %1358 = vmatmul.f32.gmra.mxu0 %v1334
      %v1359 = vpop.f32.mrf.mxu0
      %v1360 = vadd.f32 0.0, %v1359
      %1361 = vmatmul.f32.gmra.mxu0 %v1337
      %v1362 = vpop.f32.mrf.mxu0
      %v1363 = vadd.f32 0.0, %v1362
      %1364 = vdwg.mxu0
      %1365 = vrot.lane.b32.xlu0 %v661, 88
      %v1366 = vpop.permute.xlu0 %1365
      %1367 = vrot.lane.b32.xlu0 %v664, 88
      %v1368 = vpop.permute.xlu0 %1367
      %1369 = vrot.lane.b32.xlu0 %v747, 120
      %v1370 = vpop.permute.xlu0 %1369
      %1371 = vrot.lane.b32.xlu0 %v750, 120
      %v1372 = vpop.permute.xlu0 %1371
      %v1373 = vsel %vm752, %v1366, 0
      %v1375 = vsel %vm752, %v1368, 0
      %v1377 = vsel %vm752, %v1370, 0
      %v1379 = vsel %vm752, %v1372, 0
      %1381 = vmatpush.xpose.msra.mxu0 0.0
      %1382 = vmatpush.xpose.msra.mxu0 0.0
      %1383 = vmatpush.xpose.msra.mxu0 0.0
      %1384 = vmatpush.xpose.msra.mxu0 0.0
      %1385 = vmatpush.xpose.msra.mxu0 0.0
      %1386 = vmatpush.xpose.msra.mxu0 0.0
      %1387 = vmatpush.xpose.msra.mxu0 0.0
      %1388 = vmatpush.xpose.msra.mxu0 0.0
      %1389 = vmatpush.xpose.msra.mxu0 0.0
      %1390 = vmatpush.xpose.msra.mxu0 0.0
      %1391 = vmatpush.xpose.msra.mxu0 0.0
      %1392 = vmatpush.xpose.msra.mxu0 0.0
      %1393 = vmatpush.xpose.msra.mxu0 0.0
      %1394 = vmatpush.xpose.msra.mxu0 0.0
      %1395 = vmatpush.xpose.msra.mxu0 %v1379
      %1396 = vmatpush.xpose.msra.mxu0 %v1377
      %1397 = vmatmul.f32.gmra.mxu0 %v1373
      %v1398 = vpop.f32.mrf.mxu0
      %v1399 = vadd.f32 0.0, %v1398
      %1400 = vmatmul.f32.gmra.mxu0 %v1375
      %v1401 = vpop.f32.mrf.mxu0
      %v1402 = vadd.f32 0.0, %v1401
      %1403 = vdwg.mxu0
      %v1404 = vsel %vm1275, %v1399, -1e+30
      %v1405 = vsel %vm1276, %v1402, -1e+30
      %v1406 = vsel %vm1279, %v1404, -inf
      %1407 = vmax.xlane.f32.xlu0 %v1406
      %v1408 = vpop.xlane.xlu0 %1407
      %v1409 = vsel %vm1279, %v1405, -inf
      %1410 = vmax.xlane.f32.xlu0 %v1409
      %v1411 = vpop.xlane.xlu0 %1410
      %v1412 = vsub.f32 %v1404, %v1408
      %v1413 = vsub.f32 %v1405, %v1411
      %v1414 = vmul.f32 %v1412, 1.442695
      %v1415 = vpow.pop %v1414
      %v1416 = vmul.f32 %v1413, 1.442695
      %v1417 = vpow.pop %v1416
      %v1418 = vsel %vm1279, %v1415, 0.0
      %1419 = vadd.xlane.f32.xlu0 %v1418
      %v1420 = vpop.xlane.xlu0 %1419
      %v1421 = vsel %vm1279, %v1417, 0.0
      %1422 = vadd.xlane.f32.xlu0 %v1421
      %v1423 = vpop.xlane.xlu0 %1422
      %v1424 = vrcp.pop %v1420
      %v1425 = vmul.f32 %v1420, %v1424
      %v1426 = vsub.f32 1.0, %v1425
      %v1427 = vmul.f32 %v1424, %v1426
      %v1428 = vadd.f32 %v1424, %v1427
      %vm1429 = vweird.f32 %v1420
      %vm1430 = vweird.f32 %v1424
      %vm1431 = vmor %vm1429, %vm1430
      %v1432 = vsel %vm1431, %v1424, %v1428
      %v1433 = vand.u32 2147483647, %v1420
      %vm1434 = vcmp.eq.f32.partialorder %v1433, 8.507059e+37
      %v1435 = vand.u32 %v1420, 2147483648
      %v1436 = vor.u32 1.1754944e-38, %v1435
      %v1437 = vsel %vm1434, %v1436, %v1432
      %v1438 = vrcp.pop %v1423
      %v1439 = vmul.f32 %v1423, %v1438
      %v1440 = vsub.f32 1.0, %v1439
      %v1441 = vmul.f32 %v1438, %v1440
      %v1442 = vadd.f32 %v1438, %v1441
      %vm1443 = vweird.f32 %v1423
      %vm1444 = vweird.f32 %v1438
      %vm1445 = vmor %vm1443, %vm1444
      %v1446 = vsel %vm1445, %v1438, %v1442
      %v1447 = vand.u32 2147483647, %v1423
      %vm1448 = vcmp.eq.f32.partialorder %v1447, 8.507059e+37
      %v1449 = vand.u32 %v1423, 2147483648
      %v1450 = vor.u32 1.1754944e-38, %v1449
      %v1451 = vsel %vm1448, %v1450, %v1446
      %v1452 = vmul.f32 %v1415, %v1437
      %v1453 = vmul.f32 %v1417, %v1451
      %1454 = vrot.lane.b32.xlu0 %v747, 88
      %v1455 = vpop.permute.xlu0 %1454
      %1456 = vrot.lane.b32.xlu0 %v750, 88
      %v1457 = vpop.permute.xlu0 %1456
      %v1460 = vsel %vm1279, %v1452, 0
      %v1463 = vsel %vm1279, %v1453, 0
      %v1465 = vsel %vm1339, %v1457, 0
      %1467 = vmatpush.msra.mxu0 0.0
      %1468 = vmatpush.msra.mxu0 0.0
      %1469 = vmatpush.msra.mxu0 0.0
      %1470 = vmatpush.msra.mxu0 0.0
      %1471 = vmatpush.msra.mxu0 0.0
      %1472 = vmatpush.msra.mxu0 0.0
      %1473 = vmatpush.msra.mxu0 0.0
      %1474 = vmatpush.msra.mxu0 0.0
      %1475 = vmatpush.msra.mxu0 0.0
      %1476 = vmatpush.msra.mxu0 0.0
      %1477 = vmatpush.msra.mxu0 0.0
      %1478 = vmatpush.msra.mxu0 0.0
      %1479 = vmatpush.msra.mxu0 0.0
      %1480 = vmatpush.msra.mxu0 0.0
      %1481 = vmatpush.msra.mxu0 %v1465
      %1482 = vmatpush.msra.mxu0 %v1455
      %1483 = vmatmul.f32.gmra.mxu0 %v1460
      %v1484 = vpop.f32.mrf.mxu0
      %v1485 = vadd.f32 0.0, %v1484
      %1486 = vmatmul.f32.gmra.mxu0 %v1463
      %v1487 = vpop.f32.mrf.mxu0
      %v1488 = vadd.f32 0.0, %v1487
      %1489 = vdwg.mxu0
      %1490 = vrot.lane.b32.xlu0 %v661, 80
      %v1491 = vpop.permute.xlu0 %1490
      %1492 = vrot.lane.b32.xlu0 %v664, 80
      %v1493 = vpop.permute.xlu0 %1492
      %1494 = vrot.lane.b32.xlu0 %v747, 112
      %v1495 = vpop.permute.xlu0 %1494
      %1496 = vrot.lane.b32.xlu0 %v750, 112
      %v1497 = vpop.permute.xlu0 %1496
      %v1498 = vsel %vm752, %v1491, 0
      %v1500 = vsel %vm752, %v1493, 0
      %v1502 = vsel %vm752, %v1495, 0
      %v1504 = vsel %vm752, %v1497, 0
      %1506 = vmatpush.xpose.msra.mxu0 0.0
      %1507 = vmatpush.xpose.msra.mxu0 0.0
      %1508 = vmatpush.xpose.msra.mxu0 0.0
      %1509 = vmatpush.xpose.msra.mxu0 0.0
      %1510 = vmatpush.xpose.msra.mxu0 0.0
      %1511 = vmatpush.xpose.msra.mxu0 0.0
      %1512 = vmatpush.xpose.msra.mxu0 0.0
      %1513 = vmatpush.xpose.msra.mxu0 0.0
      %1514 = vmatpush.xpose.msra.mxu0 0.0
      %1515 = vmatpush.xpose.msra.mxu0 0.0
      %1516 = vmatpush.xpose.msra.mxu0 0.0
      %1517 = vmatpush.xpose.msra.mxu0 0.0
      %1518 = vmatpush.xpose.msra.mxu0 0.0
      %1519 = vmatpush.xpose.msra.mxu0 0.0
      %1520 = vmatpush.xpose.msra.mxu0 %v1504
      %1521 = vmatpush.xpose.msra.mxu0 %v1502
      %1522 = vmatmul.f32.gmra.mxu0 %v1498
      %v1523 = vpop.f32.mrf.mxu0
      %v1524 = vadd.f32 0.0, %v1523
      %1525 = vmatmul.f32.gmra.mxu0 %v1500
      %v1526 = vpop.f32.mrf.mxu0
      %v1527 = vadd.f32 0.0, %v1526
      %1528 = vdwg.mxu0
      %v1529 = vsel %vm1275, %v1524, -1e+30
      %v1530 = vsel %vm1276, %v1527, -1e+30
      %v1531 = vsel %vm1279, %v1529, -inf
      %1532 = vmax.xlane.f32.xlu0 %v1531
      %v1533 = vpop.xlane.xlu0 %1532
      %v1534 = vsel %vm1279, %v1530, -inf
      %1535 = vmax.xlane.f32.xlu0 %v1534
      %v1536 = vpop.xlane.xlu0 %1535
      %v1537 = vsub.f32 %v1529, %v1533
      %v1538 = vsub.f32 %v1530, %v1536
      %v1539 = vmul.f32 %v1537, 1.442695
      %v1540 = vpow.pop %v1539
      %v1541 = vmul.f32 %v1538, 1.442695
      %v1542 = vpow.pop %v1541
      %v1543 = vsel %vm1279, %v1540, 0.0
      %1544 = vadd.xlane.f32.xlu0 %v1543
      %v1545 = vpop.xlane.xlu0 %1544
      %v1546 = vsel %vm1279, %v1542, 0.0
      %1547 = vadd.xlane.f32.xlu0 %v1546
      %v1548 = vpop.xlane.xlu0 %1547
      %v1549 = vrcp.pop %v1545
      %v1550 = vmul.f32 %v1545, %v1549
      %v1551 = vsub.f32 1.0, %v1550
      %v1552 = vmul.f32 %v1549, %v1551
      %v1553 = vadd.f32 %v1549, %v1552
      %vm1554 = vweird.f32 %v1545
      %vm1555 = vweird.f32 %v1549
      %vm1556 = vmor %vm1554, %vm1555
      %v1557 = vsel %vm1556, %v1549, %v1553
      %v1558 = vand.u32 2147483647, %v1545
      %vm1559 = vcmp.eq.f32.partialorder %v1558, 8.507059e+37
      %v1560 = vand.u32 %v1545, 2147483648
      %v1561 = vor.u32 1.1754944e-38, %v1560
      %v1562 = vsel %vm1559, %v1561, %v1557
      %v1563 = vrcp.pop %v1548
      %v1564 = vmul.f32 %v1548, %v1563
      %v1565 = vsub.f32 1.0, %v1564
      %v1566 = vmul.f32 %v1563, %v1565
      %v1567 = vadd.f32 %v1563, %v1566
      %vm1568 = vweird.f32 %v1548
      %vm1569 = vweird.f32 %v1563
      %vm1570 = vmor %vm1568, %vm1569
      %v1571 = vsel %vm1570, %v1563, %v1567
      %v1572 = vand.u32 2147483647, %v1548
      %vm1573 = vcmp.eq.f32.partialorder %v1572, 8.507059e+37
      %v1574 = vand.u32 %v1548, 2147483648
      %v1575 = vor.u32 1.1754944e-38, %v1574
      %v1576 = vsel %vm1573, %v1575, %v1571
      %v1577 = vmul.f32 %v1540, %v1562
      %v1578 = vmul.f32 %v1542, %v1576
      %1579 = vrot.lane.b32.xlu0 %v747, 80
      %v1580 = vpop.permute.xlu0 %1579
      %1581 = vrot.lane.b32.xlu0 %v750, 80
      %v1582 = vpop.permute.xlu0 %1581
      %v1585 = vsel %vm1279, %v1577, 0
      %v1588 = vsel %vm1279, %v1578, 0
      %v1590 = vsel %vm1339, %v1582, 0
      %1592 = vmatpush.msra.mxu0 0.0
      %1593 = vmatpush.msra.mxu0 0.0
      %1594 = vmatpush.msra.mxu0 0.0
      %1595 = vmatpush.msra.mxu0 0.0
      %1596 = vmatpush.msra.mxu0 0.0
      %1597 = vmatpush.msra.mxu0 0.0
      %1598 = vmatpush.msra.mxu0 0.0
      %1599 = vmatpush.msra.mxu0 0.0
      %1600 = vmatpush.msra.mxu0 0.0
      %1601 = vmatpush.msra.mxu0 0.0
      %1602 = vmatpush.msra.mxu0 0.0
      %1603 = vmatpush.msra.mxu0 0.0
      %1604 = vmatpush.msra.mxu0 0.0
      %1605 = vmatpush.msra.mxu0 0.0
      %1606 = vmatpush.msra.mxu0 %v1590
      %1607 = vmatpush.msra.mxu0 %v1580
      %1608 = vmatmul.f32.gmra.mxu0 %v1585
      %v1609 = vpop.f32.mrf.mxu0
      %v1610 = vadd.f32 0.0, %v1609
      %1611 = vmatmul.f32.gmra.mxu0 %v1588
      %v1612 = vpop.f32.mrf.mxu0
      %v1613 = vadd.f32 0.0, %v1612
      %1614 = vdwg.mxu0
      %1615 = vrot.lane.b32.xlu0 %v661, 72
      %v1616 = vpop.permute.xlu0 %1615
      %1617 = vrot.lane.b32.xlu0 %v664, 72
      %v1618 = vpop.permute.xlu0 %1617
      %1619 = vrot.lane.b32.xlu0 %v747, 104
      %v1620 = vpop.permute.xlu0 %1619
      %1621 = vrot.lane.b32.xlu0 %v750, 104
      %v1622 = vpop.permute.xlu0 %1621
      %v1623 = vsel %vm752, %v1616, 0
      %v1625 = vsel %vm752, %v1618, 0
      %v1627 = vsel %vm752, %v1620, 0
      %v1629 = vsel %vm752, %v1622, 0
      %1631 = vmatpush.xpose.msra.mxu0 0.0
      %1632 = vmatpush.xpose.msra.mxu0 0.0
      %1633 = vmatpush.xpose.msra.mxu0 0.0
      %1634 = vmatpush.xpose.msra.mxu0 0.0
      %1635 = vmatpush.xpose.msra.mxu0 0.0
      %1636 = vmatpush.xpose.msra.mxu0 0.0
      %1637 = vmatpush.xpose.msra.mxu0 0.0
      %1638 = vmatpush.xpose.msra.mxu0 0.0
      %1639 = vmatpush.xpose.msra.mxu0 0.0
      %1640 = vmatpush.xpose.msra.mxu0 0.0
      %1641 = vmatpush.xpose.msra.mxu0 0.0
      %1642 = vmatpush.xpose.msra.mxu0 0.0
      %1643 = vmatpush.xpose.msra.mxu0 0.0
      %1644 = vmatpush.xpose.msra.mxu0 0.0
      %1645 = vmatpush.xpose.msra.mxu0 %v1629
      %1646 = vmatpush.xpose.msra.mxu0 %v1627
      %1647 = vmatmul.f32.gmra.mxu0 %v1623
      %v1648 = vpop.f32.mrf.mxu0
      %v1649 = vadd.f32 0.0, %v1648
      %1650 = vmatmul.f32.gmra.mxu0 %v1625
      %v1651 = vpop.f32.mrf.mxu0
      %v1652 = vadd.f32 0.0, %v1651
      %1653 = vdwg.mxu0
      %v1654 = vsel %vm1275, %v1649, -1e+30
      %v1655 = vsel %vm1276, %v1652, -1e+30
      %v1656 = vsel %vm1279, %v1654, -inf
      %1657 = vmax.xlane.f32.xlu0 %v1656
      %v1658 = vpop.xlane.xlu0 %1657
      %v1659 = vsel %vm1279, %v1655, -inf
      %1660 = vmax.xlane.f32.xlu0 %v1659
      %v1661 = vpop.xlane.xlu0 %1660
      %v1662 = vsub.f32 %v1654, %v1658
      %v1663 = vsub.f32 %v1655, %v1661
      %v1664 = vmul.f32 %v1662, 1.442695
      %v1665 = vpow.pop %v1664
      %v1666 = vmul.f32 %v1663, 1.442695
      %v1667 = vpow.pop %v1666
      %v1668 = vsel %vm1279, %v1665, 0.0
      %1669 = vadd.xlane.f32.xlu0 %v1668
      %v1670 = vpop.xlane.xlu0 %1669
      %v1671 = vsel %vm1279, %v1667, 0.0
      %1672 = vadd.xlane.f32.xlu0 %v1671
      %v1673 = vpop.xlane.xlu0 %1672
      %v1674 = vrcp.pop %v1670
      %v1675 = vmul.f32 %v1670, %v1674
      %v1676 = vsub.f32 1.0, %v1675
      %v1677 = vmul.f32 %v1674, %v1676
      %v1678 = vadd.f32 %v1674, %v1677
      %vm1679 = vweird.f32 %v1670
      %vm1680 = vweird.f32 %v1674
      %vm1681 = vmor %vm1679, %vm1680
      %v1682 = vsel %vm1681, %v1674, %v1678
      %v1683 = vand.u32 2147483647, %v1670
      %vm1684 = vcmp.eq.f32.partialorder %v1683, 8.507059e+37
      %v1685 = vand.u32 %v1670, 2147483648
      %v1686 = vor.u32 1.1754944e-38, %v1685
      %v1687 = vsel %vm1684, %v1686, %v1682
      %v1688 = vrcp.pop %v1673
      %v1689 = vmul.f32 %v1673, %v1688
      %v1690 = vsub.f32 1.0, %v1689
      %v1691 = vmul.f32 %v1688, %v1690
      %v1692 = vadd.f32 %v1688, %v1691
      %vm1693 = vweird.f32 %v1673
      %vm1694 = vweird.f32 %v1688
      %vm1695 = vmor %vm1693, %vm1694
      %v1696 = vsel %vm1695, %v1688, %v1692
      %v1697 = vand.u32 2147483647, %v1673
      %vm1698 = vcmp.eq.f32.partialorder %v1697, 8.507059e+37
      %v1699 = vand.u32 %v1673, 2147483648
      %v1700 = vor.u32 1.1754944e-38, %v1699
      %v1701 = vsel %vm1698, %v1700, %v1696
      %v1702 = vmul.f32 %v1665, %v1687
      %v1703 = vmul.f32 %v1667, %v1701
      %1704 = vrot.lane.b32.xlu0 %v747, 72
      %v1705 = vpop.permute.xlu0 %1704
      %1706 = vrot.lane.b32.xlu0 %v750, 72
      %v1707 = vpop.permute.xlu0 %1706
      %v1710 = vsel %vm1279, %v1702, 0
      %v1713 = vsel %vm1279, %v1703, 0
      %v1715 = vsel %vm1339, %v1707, 0
      %1717 = vmatpush.msra.mxu0 0.0
      %1718 = vmatpush.msra.mxu0 0.0
      %1719 = vmatpush.msra.mxu0 0.0
      %1720 = vmatpush.msra.mxu0 0.0
      %1721 = vmatpush.msra.mxu0 0.0
      %1722 = vmatpush.msra.mxu0 0.0
      %1723 = vmatpush.msra.mxu0 0.0
      %1724 = vmatpush.msra.mxu0 0.0
      %1725 = vmatpush.msra.mxu0 0.0
      %1726 = vmatpush.msra.mxu0 0.0
      %1727 = vmatpush.msra.mxu0 0.0
      %1728 = vmatpush.msra.mxu0 0.0
      %1729 = vmatpush.msra.mxu0 0.0
      %1730 = vmatpush.msra.mxu0 0.0
      %1731 = vmatpush.msra.mxu0 %v1715
      %1732 = vmatpush.msra.mxu0 %v1705
      %1733 = vmatmul.f32.gmra.mxu0 %v1710
      %v1734 = vpop.f32.mrf.mxu0
      %v1735 = vadd.f32 0.0, %v1734
      %1736 = vmatmul.f32.gmra.mxu0 %v1713
      %v1737 = vpop.f32.mrf.mxu0
      %v1738 = vadd.f32 0.0, %v1737
      %1739 = vdwg.mxu0
      %1742 = vrot.lane.b32.xlu0 %v1485, 8
      %v1743 = vpop.permute.xlu0 %1742
      %1744 = vrot.lane.b32.xlu0 %v1488, 8
      %v1745 = vpop.permute.xlu0 %1744
      %1750 = vrot.lane.b32.xlu0 %v1610, 16
      %v1751 = vpop.permute.xlu0 %1750
      %1752 = vrot.lane.b32.xlu0 %v1613, 16
      %v1753 = vpop.permute.xlu0 %1752
      %1758 = vrot.lane.b32.xlu0 %v1735, 24
      %v1759 = vpop.permute.xlu0 %1758
      %1760 = vrot.lane.b32.xlu0 %v1738, 24
      %v1761 = vpop.permute.xlu0 %1760
      %v1764 = vsel %vm752, %v1360, %v1743
      %v1765 = vsel %vm752, %v1363, %v1745
      %v1766 = vsel %vm669, %v1764, %v1751
      %v1767 = vsel %vm669, %v1765, %v1753
      %v1768 = vsel %vm722, %v1766, %v1759
      %v1769 = vsel %vm722, %v1767, %v1761
      %1771 = vset.pattern.permute.xlu0 0
      %1772 = vperm.xlu0 %1771, %v606
      %v1773 = vpop.permute.xlu0 %1772
      %1776 = vset.pattern.permute.xlu0 0
      %1777 = vperm.xlu0 %1776, %v607
      %v1778 = vpop.permute.xlu0 %1777
      %v1780 = vmul.f32 %v1768, %v1773
      %v1781 = vmul.f32 %v1769, %v1778
      %v1783 = vperm.slane %v632, 0
      %v1785 = vmul.f32 %v1783, %v606
      %v1786 = vmul.f32 %v1783, %v607
      %v1788 = vperm.slane %v631, 0
      %v1790 = vadd.f32 %v1788, %v1785
      %v1791 = vadd.f32 %v1788, %v1786
      %1794 = vrot.lane.b32.xlu0 %v1780, 32
      %v1795 = vpop.permute.xlu0 %1794
      %1796 = vrot.lane.b32.xlu0 %v1781, 32
      %v1797 = vpop.permute.xlu0 %1796
      %v1800 = vsel %vm636, %v1236, %v1795
      %v1801 = vsel %vm636, %v1237, %v1797
      %vm1802 = vcmask 523264
      %v1804 = vsel %vm1802, %v1800, 0
      %v1807 = vsel %vm1802, %v1801, 0
      %1809 = vmatpush.msra.mxu0 0.0
      %1810 = vmatpush.msra.mxu0 0.0
      %1811 = vmatpush.msra.mxu0 0.0
      %1812 = vmatpush.msra.mxu0 0.0
      %1813 = vmatpush.msra.mxu0 0.0
      %1814 = vmatpush.msra.mxu0 0.0
      %1815 = vmatpush.msra.mxu0 0.0
      %1816 = vmatpush.msra.mxu0 0.0
      %1817 = vmatpush.msra.mxu0 %v630
      %1818 = vmatpush.msra.mxu0 %v629
      %1819 = vmatpush.msra.mxu0 %v628
      %1820 = vmatpush.msra.mxu0 %v627
      %1821 = vmatpush.msra.mxu0 %v626
      %1822 = vmatpush.msra.mxu0 %v625
      %1823 = vmatpush.msra.mxu0 %v624
      %1824 = vmatpush.msra.mxu0 %v623
      %1825 = vmatmul.f32.gmra.mxu0 %v1804
      %v1826 = vpop.f32.mrf.mxu0
      %v1827 = vadd.f32 %v1790, %v1826
      %1828 = vmatmul.f32.gmra.mxu0 %v1807
      %v1829 = vpop.f32.mrf.mxu0
      %v1830 = vadd.f32 %v1791, %v1829
      %1831 = vdwg.mxu0
      %vm1832 = vcmask 7168
      %1833 = vst.msk [vmem:[%s599] sm:$0xff] %vm1832, %v1827
      %1834 = vst.msk [vmem:[%s599 + $0x8] sm:$0xff] %vm1832, %v1830
      %p1835 = scmp.lt.s32.totalorder %s31, 1
      %s1836 = scalar_select %p1835, %s31, 1
      %s1837 = smul.addr %s1836, 2
      %s1838 = smul.addr %s1837, 8
      %s1839 = scalar_lea.vmem %s16, %s1838
      // Predicated region
      $region85: #{tpu_custom_call.1} parent=83 // pred_check
        %p1840 = pneg %p410
      $region86: #{tpu_custom_call.1} parent=83 // pred_check_branch
        %1842 = sbr.rel (%p1840) target = $region88
      $region87: #{tpu_custom_call.1} parent=83 // pred_region
        _
      $region88: #{tpu_custom_call.1} parent=83 // pred_fallthru
        _
    $region84: #{tpu_custom_call.1} parent=5 // pred_fallthru
      _
    %p1843 = scmp.le.s32.totalorder 2, %s26
    // Predicated region
    $region89: #{tpu_custom_call.1} parent=5 // pred_check
      %p1844 = pneg %p1843
    $region90: #{tpu_custom_call.1} parent=5 // pred_check_branch
      %1846 = sbr.rel (%p1844) target = $region92
    $region91: #{tpu_custom_call.1} parent=5 // pred_region
      %s1847 = ssub.s32 %s26, 2
      // Predicated region
      $region93: #{tpu_custom_call.1} parent=91 // pred_check
        %p1848 = pneg %p416
      $region94: #{tpu_custom_call.1} parent=91 // pred_check_branch
        %1850 = sbr.rel (%p1848) target = $region96
      $region95: #{tpu_custom_call.1} parent=91 // pred_region
        %p1851 = scmp.lt.s32.totalorder %s32, 1
        %s1852 = scalar_select %p1851, %s32, 1
        %s1853 = smul.addr %s1852, 2
        %s1854 = smul.addr %s1853, 8
        %s1855 = scalar_lea.vmem %s16, %s1854
      $region96: #{tpu_custom_call.1} parent=91 // pred_fallthru
        _
    $region92: #{tpu_custom_call.1} parent=5 // pred_fallthru
      _
  $region6: #{tpu_custom_call.1} parent=0 // loop_footer
    %s30 = sadd.s32 1, %s26
  $region7: #{tpu_custom_call.1} parent=0 // loop_footer_branch
    %25 = sbr.rel target = $region3
  $region8: #{tpu_custom_call.1} parent=0 // loop_exit
    _

</llo_original>
